<compile_context>
chip_gen: v7x
topology: tpu7x:2x2x1
jax: 0.10.0
libtpu: 0.0.40
codegen_flags: <defaults>
</compile_context>

<pallas_src>
import functools
import math

import jax
import jax.numpy as jnp
from jax.experimental import pallas as pl
from jax.experimental.pallas import tpu as pltpu

N_HEAD = 4
EPS = 1e-5                 # PyTorch nn.LayerNorm default
NEG_INF = -1e30            # large finite negative (safe even for fully-masked columns)


def _layernorm(x, g, b):
    mu = jnp.mean(x, axis=-1, keepdims=True)
    var = jnp.mean((x - mu) ** 2, axis=-1, keepdims=True)
    return (x - mu) * jax.lax.rsqrt(var + EPS) * g + b


def _gelu_tanh(x):
    # GELU(approximate='tanh'), kept in f32 (v5e has no bf16 VPU/EUP path)
    c = math.sqrt(2.0 / math.pi)
    return 0.5 * x * (1.0 + jnp.tanh(c * (x + 0.044715 * x * x * x)))


def _recip(x):
    if hasattr(pl, "reciprocal"):
        return pl.reciprocal(x, approx=True)   # EUP vrcp — essentially free
    return 1.0 / x


def _aligned(x, m):
    if hasattr(pl, "multiple_of"):
        return pl.multiple_of(x, m)
    return x


def _vmem_limit_bytes():
    # v5e/v6e: 128 MiB VMEM per core, v7x: 64 MiB — take ~85% and cap at 112 MiB.
    try:
        cap = pltpu.get_tpu_info().vmem_capacity_bytes
        return int(min(cap * 0.85, 112 * 1024 * 1024))
    except Exception:
        return 48 * 1024 * 1024


def _const_spec(shape, single_buffer):
    """BlockSpec for an operand whose block index is constant across the grid."""
    nd = len(shape)
    index_map = lambda *_, _nd=nd: (0,) * _nd
    if single_buffer and hasattr(pl, "Buffered"):
        # constant block index -> single buffer halves its VMEM footprint
        return pl.BlockSpec(shape, index_map, pipeline_mode=pl.Buffered(1))
    return pl.BlockSpec(shape, index_map)


# --------------------- kernel 1: ln_1 + qkv projection (head-major out) ---------------------
def qkv_kernel(x_ref, g_ref, b_ref, w_ref, bw_ref, q_ref, k_ref, v_ref, *, n_head):
    h = _layernorm(x_ref[...], g_ref[...], b_ref[...])            # (tq, C) f32
    qkv = jnp.dot(h.astype(w_ref.dtype), w_ref[...],
                  preferred_element_type=jnp.float32) + bw_ref[...]
    qkv = qkv.astype(q_ref.dtype)                                 # (tq, 3C)
    C = qkv.shape[1] // 3
    hd = C // n_head
    # Split heads onto a leading axis once here, so kernel 2's KV loop only ever
    # touches lane-0-aligned per-head tiles (no hd-offset lane slicing in the hot loop).
    for hi in range(n_head):
        q_ref[hi] = qkv[:, hi * hd:(hi + 1) * hd]
        k_ref[hi] = qkv[:, C + hi * hd:C + (hi + 1) * hd]
        v_ref[hi] = qkv[:, 2 * C + hi * hd:2 * C + (hi + 1) * hd]


# ---------- kernel 2: flash attention + proj + residual + ln_2 + MLP + residual ----------
def attn_mlp_kernel(x_ref, q_ref, k_ref, v_ref,
                    w_ap_ref, b_ap_ref, ln2_g_ref, ln2_b_ref,
                    w_fc_ref, b_fc_ref, w_mp_ref, b_mp_ref,
                    o_ref, m_sc, l_sc, acc_sc, *, n_head, nq, tk):
    x = x_ref[...]                              # (tq, C) f32 residual rows
    tq, C = x.shape
    cdt = w_ap_ref.dtype                        # matmul compute dtype (bf16 or f32)

    # q-tile index after the load-balancing "fold" permutation (must match index_maps)
    i = pl.program_id(1)
    half = i // 2
    qi = half + (i % 2) * (nq - 1 - 2 * half)
    row0 = qi * tq

    q = q_ref[...]                              # (n_head, tq, hd), already 1/sqrt(hd)-scaled

    m_sc[...] = jnp.full(m_sc.shape, NEG_INF, jnp.float32)
    l_sc[...] = jnp.zeros(l_sc.shape, jnp.float32)
    acc_sc[...] = jnp.zeros(acc_sc.shape, jnp.float32)

    # hoisted once per grid step (JAX does not CSE broadcast_in_dim)
    q_pos = row0 + jax.lax.broadcasted_iota(jnp.int32, (tq, 1), 0)

    def kv_chunk(start, masked):
        k = k_ref[:, pl.ds(start, tk), :]       # (n_head, tk, hd) lane-dense loads
        v = v_ref[:, pl.ds(start, tk), :]
        s = jnp.einsum('htd,hsd->hts', q, k,
                       preferred_element_type=jnp.float32)        # (n_head, tq, tk)
        if masked:
            kv_pos = start + jax.lax.broadcasted_iota(jnp.int32, (1, tk), 1)
            s = jnp.where(q_pos >= kv_pos, s, NEG_INF)
        m_prev = m_sc[...]
        m_new = jnp.maximum(m_prev, jnp.max(s, axis=-1, keepdims=True))
        alpha = jnp.exp(m_prev - m_new)
        p = jnp.exp(s - m_new)
        l_sc[...] = alpha * l_sc[...] + jnp.sum(p, axis=-1, keepdims=True)
        acc_sc[...] = alpha * acc_sc[...] + jnp.einsum(
            'hts,hsd->htd', p.astype(cdt), v, preferred_element_type=jnp.float32)
        m_sc[...] = m_new

    # chunks entirely below the diagonal need no mask; only the tail chunk(s) do.
    n_unmasked = row0 // tk
    n_total = (row0 + tq + tk - 1) // tk        # T % tk == 0 guaranteed by the wrapper

    def unmasked_body(j, carry):
        kv_chunk(_aligned(j * tk, tk), masked=False)
        return carry

    def masked_body(j, carry):
        kv_chunk(_aligned(j * tk, tk), masked=True)
        return carry

    jax.lax.fori_loop(0, n_unmasked, unmasked_body, 0)
    jax.lax.fori_loop(n_unmasked, n_total, masked_body, 0)

    # attention out-projection: per-head lane-dense (tq,hd)@(hd,C) dots, summed —
    # no (tq,C) head re-assembly scratch / masked partial stores on the critical path.
    y = (acc_sc[...] * _recip(l_sc[...])).astype(cdt)             # (n_head, tq, hd)
    attn = jnp.dot(y[0], w_ap_ref[0], preferred_element_type=jnp.float32)
    for hi in range(1, n_head):
        attn = attn + jnp.dot(y[hi], w_ap_ref[hi],
                              preferred_element_type=jnp.float32)
    x1 = x + attn + b_ap_ref[...]                                 # f32 residual

    h2 = _layernorm(x1, ln2_g_ref[...], ln2_b_ref[...])
    ff = jnp.dot(h2.astype(cdt), w_fc_ref[...],
                 preferred_element_type=jnp.float32) + b_fc_ref[...]
    ff = _gelu_tanh(ff)                                           # (tq, 4C) only
    mlp = jnp.dot(ff.astype(cdt), w_mp_ref[...],
                  preferred_element_type=jnp.float32) + b_mp_ref[...]
    # at real model sizes C is a multiple of 128, so this store is lane-dense
    o_ref[...] = (x1 + mlp).astype(o_ref.dtype)


# ------------------------------------ wrapper ------------------------------------
def _gpt_block_impl(x, params, compute_dtype, tile, single_buffer_weights):
    (ln1_g, ln1_b, w_attn, b_attn, w_aproj, b_aproj,
     ln2_g, ln2_b, w_fc, b_fc, w_mproj, b_mproj) = params
    B, T, C = x.shape
    assert C % N_HEAD == 0
    hd = C // N_HEAD
    tq = min(tile, T)
    assert T % tq == 0, "sequence length must be divisible by the row tile"
    nq = T // tq
    # KV chunk: 256 fills the 2x256^2 MXU on v6e/v7x; fall back to the row tile size.
    tk = 256 if (256 >= tq and T % 256 == 0) else tq
    cdt = compute_dtype

    # fold the 1/sqrt(hd) attention scale into the Q projection (free at trace time,
    # removes an n_head x (tq,tk) VPU multiply per KV step in the kernel)
    scale = 1.0 / math.sqrt(hd)
    col_scale = jnp.concatenate(
        [jnp.full((1, C), scale, jnp.float32), jnp.ones((1, 2 * C), jnp.float32)], axis=1)
    # cast matmul weights to the compute dtype (bf16 default): native MXU rate and half
    # the weight DMA/VMEM; biases / LN params / residuals stay f32
    w_attn_c = (w_attn * col_scale).astype(cdt)
    b_attn_s = (b_attn * col_scale).astype(jnp.float32)
    w_aproj_hm = w_aproj.reshape(N_HEAD, hd, C).astype(cdt)   # per-head (hd, C) blocks
    w_fc_c = w_fc.astype(cdt)
    w_mproj_c = w_mproj.astype(cdt)

    sb = single_buffer_weights
    cspec = functools.partial(_const_spec, single_buffer=sb)
    cparams = pltpu.CompilerParams(
        dimension_semantics=("parallel", "parallel"),
        vmem_limit_bytes=_vmem_limit_bytes())

    # ---- kernel 1: ln_1 + fused qkv projection, emitted head-major ----
    hm_shape = jax.ShapeDtypeStruct((B, N_HEAD, T, hd), cdt)
    hm_out_spec = pl.BlockSpec((None, N_HEAD, tq, hd), lambda b, i: (b, 0, i, 0))
    q_hm, k_hm, v_hm = pl.pallas_call(
        functools.partial(qkv_kernel, n_head=N_HEAD),
        out_shape=(hm_shape, hm_shape, hm_shape),
        grid_spec=pltpu.PrefetchScalarGridSpec(
            num_scalar_prefetch=0,
            grid=(B, nq),
            in_specs=[
                pl.BlockSpec((None, tq, C), lambda b, i: (b, i, 0)),
                cspec((1, C)), cspec((1, C)),
                cspec((C, 3 * C)), cspec((1, 3 * C)),
            ],
            out_specs=[hm_out_spec] * 3,
        ),
        compiler_params=cparams,
    )(x, ln1_g, ln1_b, w_attn_c, b_attn_s)

    # ---- kernel 2: flash attention + proj + residual + ln_2 + MLP + residual ----
    # "fold" permutation of the q-tile axis: pairs tile h with nq-1-h so any contiguous
    # megacore split of the grid carries equal causal-triangle work (v7x); bijection.
    def perm(i):
        half = i // 2
        return half + (i % 2) * (nq - 1 - 2 * half)

    out = pl.pallas_call(
        functools.partial(attn_mlp_kernel, n_head=N_HEAD, nq=nq, tk=tk),
        out_shape=jax.ShapeDtypeStruct((B, T, C), x.dtype),
        grid_spec=pltpu.PrefetchScalarGridSpec(
            num_scalar_prefetch=0,
            grid=(B, nq),
            in_specs=[
                pl.BlockSpec((None, tq, C), lambda b, i: (b, perm(i), 0)),             # x rows
                pl.BlockSpec((None, N_HEAD, tq, hd), lambda b, i: (b, 0, perm(i), 0)),  # Q rows
                # K/V resident per batch (block index changes only with b).
                pl.BlockSpec((None, N_HEAD, T, hd), lambda b, i: (b, 0, 0, 0)),
                pl.BlockSpec((None, N_HEAD, T, hd), lambda b, i: (b, 0, 0, 0)),
                cspec((N_HEAD, hd, C)), cspec((1, C)),                                  # attn c_proj
                cspec((1, C)), cspec((1, C)),                                           # ln_2
                cspec((C, 4 * C)), cspec((1, 4 * C)),                                   # mlp c_fc
                cspec((4 * C, C)), cspec((1, C)),                                       # mlp c_proj
            ],
            out_specs=pl.BlockSpec((None, tq, C), lambda b, i: (b, perm(i), 0)),
            scratch_shapes=[
                pltpu.VMEM((N_HEAD, tq, 1), jnp.float32),    # m (online-softmax max)
                pltpu.VMEM((N_HEAD, tq, 1), jnp.float32),    # l (online-softmax sum)
                pltpu.VMEM((N_HEAD, tq, hd), jnp.float32),   # acc
            ],
        ),
        compiler_params=cparams,
    )(x, q_hm, k_hm, v_hm, w_aproj_hm, b_aproj, ln2_g, ln2_b,
      w_fc_c, b_fc, w_mproj_c, b_mproj)
    return out


def gpt_block(x, params, *, compute_dtype=jnp.bfloat16, tile=128):
    """GPT Block forward: x = x + attn(ln_1(x)); x = x + mlp(ln_2(x))."""
    try:
        return _gpt_block_impl(x, params, compute_dtype, tile, True)
    except Exception:
        # Retry only with default buffering for the constant-index weight specs
        # (Buffered(1) unsupported on some builds); if the failure was unrelated,
        # the retry hits the same error and re-raises it.
        return _gpt_block_impl(x, params, compute_dtype, tile, False)


# ---------------- pure-JAX reference (mirrors the PyTorch forward, f32) ----------------
def reference(x, params):
    (ln1_g, ln1_b, w_attn, b_attn, w_aproj, b_aproj,
     ln2_g, ln2_b, w_fc, b_fc, w_mproj, b_mproj) = params
    B, T, C = x.shape
    hd = C // N_HEAD

    def ln(z, g, b):
        mu = jnp.mean(z, -1, keepdims=True)
        var = jnp.mean((z - mu) ** 2, -1, keepdims=True)
        return (z - mu) / jnp.sqrt(var + EPS) * g[0] + b[0]

    h = ln(x, ln1_g, ln1_b)
    qkv = h @ w_attn + b_attn[0]
    q, k, v = jnp.split(qkv, 3, axis=-1)
    q = q.reshape(B, T, N_HEAD, hd).transpose(0, 2, 1, 3)
    k = k.reshape(B, T, N_HEAD, hd).transpose(0, 2, 1, 3)
    v = v.reshape(B, T, N_HEAD, hd).transpose(0, 2, 1, 3)
    s = jnp.einsum('bhtd,bhsd->bhts', q, k) / math.sqrt(hd)
    mask = jnp.tril(jnp.ones((T, T), bool))
    s = jnp.where(mask, s, -jnp.inf)
    p = jax.nn.softmax(s, axis=-1)
    y = jnp.einsum('bhts,bhsd->bhtd', p, v).transpose(0, 2, 1, 3).reshape(B, T, C)
    x1 = x + (y @ w_aproj + b_aproj[0])
    h2 = ln(x1, ln2_g, ln2_b)
    ff = h2 @ w_fc + b_fc[0]
    cst = math.sqrt(2.0 / math.pi)
    ff = 0.5 * ff * (1.0 + jnp.tanh(cst * (ff + 0.044715 * ff ** 3)))
    return x1 + (ff @ w_mproj + b_mproj[0])


if __name__ == "__main__":
    B, T, C = 2, 8, 32           # block_size >= T, n_embd=32, n_head=4
    key = jax.random.PRNGKey(0)
    kx, kw = jax.random.split(key)
    x = jax.random.normal(kx, (B, T, C), jnp.float32)
    wks = jax.random.split(kw, 8)

    def rnd(k, shape, s=0.02):
        return jax.random.normal(k, shape, jnp.float32) * s

    params = [
        jnp.ones((1, C), jnp.float32),      # ln1 gamma
        jnp.zeros((1, C), jnp.float32),     # ln1 beta
        rnd(wks[0], (C, 3 * C)),            # c_attn weight (in, out)
        rnd(wks[1], (1, 3 * C)),            # c_attn bias
        rnd(wks[2], (C, C)),                # attn c_proj weight
        rnd(wks[3], (1, C)),                # attn c_proj bias
        jnp.ones((1, C), jnp.float32),      # ln2 gamma
        jnp.zeros((1, C), jnp.float32),     # ln2 beta
        rnd(wks[4], (C, 4 * C)),            # mlp c_fc weight
        rnd(wks[5], (1, 4 * C)),            # mlp c_fc bias
        rnd(wks[6], (4 * C, C)),            # mlp c_proj weight
        rnd(wks[7], (1, C)),                # mlp c_proj bias
    ]

    ref = reference(x, params)

    # f32 matmul path — tight check against the PyTorch-equivalent reference
    out_f32 = jax.block_until_ready(gpt_block(x, params, compute_dtype=jnp.float32))
    assert out_f32.shape == (B, T, C)
    assert jnp.allclose(out_f32, ref, atol=2e-3, rtol=2e-3), \
        float(jnp.max(jnp.abs(out_f32 - ref)))

    # default bf16-MXU path (f32 accumulation) — looser tolerance (K/V quantized to bf16)
    out_bf16 = jax.block_until_ready(gpt_block(x, params))
    assert out_bf16.shape == (B, T, C)
    assert jnp.allclose(out_bf16, ref, atol=2e-2, rtol=2e-2), \
        float(jnp.max(jnp.abs(out_bf16 - ref)))

    print("KERNEL_OK")
</pallas_src>

<mosaic_0001>
module attributes {stable_mosaic.version = 11 : i64} {
  func.func @qkv_kernel(%arg0: i32, %arg1: i32, %arg2: memref<1x8x32xf32, #tpu.memory_space<vmem>>, %arg3: memref<1x32xf32, #tpu.memory_space<vmem>>, %arg4: memref<1x32xf32, #tpu.memory_space<vmem>>, %arg5: memref<32x96xf32, #tpu.memory_space<vmem>>, %arg6: memref<1x96xf32, #tpu.memory_space<vmem>>, %arg7: memref<1x4x8x8xf32, #tpu.memory_space<vmem>>, %arg8: memref<1x4x8x8xf32, #tpu.memory_space<vmem>>, %arg9: memref<1x4x8x8xf32, #tpu.memory_space<vmem>>) attributes {dimension_semantics = [#tpu.dimension_semantics<parallel>, #tpu.dimension_semantics<parallel>], iteration_bounds = array<i64: 2, 1>, scalar_prefetch = 0 : i64, scratch_operands = 0 : i64, tpu.core_type = #tpu.core_type<tc>, window_params = [{transform_indices = @transform_0, window_bounds = array<i64: 1, 8, 32>}, {pipeline_mode = #tpu.pipeline_mode<synchronous>, transform_indices = @transform_1, window_bounds = array<i64: 1, 32>}, {pipeline_mode = #tpu.pipeline_mode<synchronous>, transform_indices = @transform_2, window_bounds = array<i64: 1, 32>}, {pipeline_mode = #tpu.pipeline_mode<synchronous>, transform_indices = @transform_3, window_bounds = array<i64: 32, 96>}, {pipeline_mode = #tpu.pipeline_mode<synchronous>, transform_indices = @transform_4, window_bounds = array<i64: 1, 96>}, {transform_indices = @transform_5, window_bounds = array<i64: 1, 4, 8, 8>}, {transform_indices = @transform_6, window_bounds = array<i64: 1, 4, 8, 8>}, {transform_indices = @transform_7, window_bounds = array<i64: 1, 4, 8, 8>}]} {
    %c0 = arith.constant 0 : index
    %c0_0 = arith.constant 0 : index
    %c0_1 = arith.constant 0 : index
    %0 = vector.load %arg2[%c0, %c0_0, %c0_1] : memref<1x8x32xf32, #tpu.memory_space<vmem>>, vector<1x8x32xf32>
    %1 = vector.shape_cast %0 : vector<1x8x32xf32> to vector<8x32xf32>
    %c0_2 = arith.constant 0 : index
    %c0_3 = arith.constant 0 : index
    %2 = vector.load %arg3[%c0_2, %c0_3] : memref<1x32xf32, #tpu.memory_space<vmem>>, vector<1x32xf32>
    %c0_4 = arith.constant 0 : index
    %c0_5 = arith.constant 0 : index
    %3 = vector.load %arg4[%c0_4, %c0_5] : memref<1x32xf32, #tpu.memory_space<vmem>>, vector<1x32xf32>
    %cst = arith.constant dense<0.000000e+00> : vector<8xf32>
    %4 = vector.multi_reduction <add>, %1, %cst [1] : vector<8x32xf32> to vector<8xf32>
    %5 = vector.shape_cast %4 : vector<8xf32> to vector<8x1xf32>
    %cst_6 = arith.constant 3.200000e+01 : f32
    %6 = vector.broadcast %cst_6 : f32 to vector<8x1xf32>
    %7 = arith.divf %5, %6 : vector<8x1xf32>
    %8 = vector.broadcast %7 : vector<8x1xf32> to vector<8x32xf32>
    %9 = arith.subf %1, %8 : vector<8x32xf32>
    %10 = arith.mulf %9, %9 : vector<8x32xf32>
    %cst_7 = arith.constant dense<0.000000e+00> : vector<8xf32>
    %11 = vector.multi_reduction <add>, %10, %cst_7 [1] : vector<8x32xf32> to vector<8xf32>
    %12 = vector.shape_cast %11 : vector<8xf32> to vector<8x1xf32>
    %cst_8 = arith.constant 3.200000e+01 : f32
    %13 = vector.broadcast %cst_8 : f32 to vector<8x1xf32>
    %14 = arith.divf %12, %13 : vector<8x1xf32>
    %15 = vector.broadcast %7 : vector<8x1xf32> to vector<8x32xf32>
    %16 = arith.subf %1, %15 : vector<8x32xf32>
    %cst_9 = arith.constant 9.99999974E-6 : f32
    %17 = vector.broadcast %cst_9 : f32 to vector<8x1xf32>
    %18 = arith.addf %14, %17 : vector<8x1xf32>
    %19 = math.rsqrt %18 : vector<8x1xf32>
    %20 = vector.broadcast %19 : vector<8x1xf32> to vector<8x32xf32>
    %21 = arith.mulf %16, %20 : vector<8x32xf32>
    %22 = vector.broadcast %2 : vector<1x32xf32> to vector<8x32xf32>
    %23 = arith.mulf %21, %22 : vector<8x32xf32>
    %24 = vector.broadcast %3 : vector<1x32xf32> to vector<8x32xf32>
    %25 = arith.addf %23, %24 : vector<8x32xf32>
    %c0_10 = arith.constant 0 : index
    %c0_11 = arith.constant 0 : index
    %26 = vector.load %arg5[%c0_10, %c0_11] : memref<32x96xf32, #tpu.memory_space<vmem>>, vector<32x96xf32>
    %cst_12 = arith.constant dense<0.000000e+00> : vector<8x96xf32>
    %27 = tpu.matmul %25, %26, %cst_12 {dimension_numbers = #tpu.dot_dimension_numbers<[1], [0], [0], [1], [0, 0, 1, 1], [], []>} : vector<8x32xf32>, vector<32x96xf32>, vector<8x96xf32> -> vector<8x96xf32>
    %c0_13 = arith.constant 0 : index
    %c0_14 = arith.constant 0 : index
    %28 = vector.load %arg6[%c0_13, %c0_14] : memref<1x96xf32, #tpu.memory_space<vmem>>, vector<1x96xf32>
    %29 = vector.broadcast %28 : vector<1x96xf32> to vector<8x96xf32>
    %30 = arith.addf %27, %29 : vector<8x96xf32>
    %31 = vector.extract_strided_slice %30 {offsets = [0, 0], sizes = [8, 8], strides = [1, 1]} : vector<8x96xf32> to vector<8x8xf32>
    %c0_15 = arith.constant 0 : index
    %c0_16 = arith.constant 0 : index
    %c0_17 = arith.constant 0 : index
    %c0_18 = arith.constant 0 : index
    %32 = vector.load %arg7[%c0_15, %c0_16, %c0_17, %c0_18] : memref<1x4x8x8xf32, #tpu.memory_space<vmem>>, vector<1x1x8x8xf32>
    %33 = vector.shape_cast %32 : vector<1x1x8x8xf32> to vector<8x8xf32>
    %34 = vector.shape_cast %31 : vector<8x8xf32> to vector<1x1x8x8xf32>
    tpu.vector_store %arg7[%c0_15, %c0_16, %c0_17, %c0_18], %34 {strides = array<i32>} : memref<1x4x8x8xf32, #tpu.memory_space<vmem>>, vector<1x1x8x8xf32>,
    %35 = vector.extract_strided_slice %30 {offsets = [0, 32], sizes = [8, 8], strides = [1, 1]} : vector<8x96xf32> to vector<8x8xf32>
    %c0_19 = arith.constant 0 : index
    %c0_20 = arith.constant 0 : index
    %c0_21 = arith.constant 0 : index
    %c0_22 = arith.constant 0 : index
    %36 = vector.load %arg8[%c0_19, %c0_20, %c0_21, %c0_22] : memref<1x4x8x8xf32, #tpu.memory_space<vmem>>, vector<1x1x8x8xf32>
    %37 = vector.shape_cast %36 : vector<1x1x8x8xf32> to vector<8x8xf32>
    %38 = vector.shape_cast %35 : vector<8x8xf32> to vector<1x1x8x8xf32>
    tpu.vector_store %arg8[%c0_19, %c0_20, %c0_21, %c0_22], %38 {strides = array<i32>} : memref<1x4x8x8xf32, #tpu.memory_space<vmem>>, vector<1x1x8x8xf32>,
    %39 = vector.extract_strided_slice %30 {offsets = [0, 64], sizes = [8, 8], strides = [1, 1]} : vector<8x96xf32> to vector<8x8xf32>
    %c0_23 = arith.constant 0 : index
    %c0_24 = arith.constant 0 : index
    %c0_25 = arith.constant 0 : index
    %c0_26 = arith.constant 0 : index
    %40 = vector.load %arg9[%c0_23, %c0_24, %c0_25, %c0_26] : memref<1x4x8x8xf32, #tpu.memory_space<vmem>>, vector<1x1x8x8xf32>
    %41 = vector.shape_cast %40 : vector<1x1x8x8xf32> to vector<8x8xf32>
    %42 = vector.shape_cast %39 : vector<8x8xf32> to vector<1x1x8x8xf32>
    tpu.vector_store %arg9[%c0_23, %c0_24, %c0_25, %c0_26], %42 {strides = array<i32>} : memref<1x4x8x8xf32, #tpu.memory_space<vmem>>, vector<1x1x8x8xf32>,
    %43 = vector.extract_strided_slice %30 {offsets = [0, 8], sizes = [8, 8], strides = [1, 1]} : vector<8x96xf32> to vector<8x8xf32>
    %c0_27 = arith.constant 0 : index
    %c1 = arith.constant 1 : index
    %c0_28 = arith.constant 0 : index
    %c0_29 = arith.constant 0 : index
    %44 = vector.load %arg7[%c0_27, %c1, %c0_28, %c0_29] : memref<1x4x8x8xf32, #tpu.memory_space<vmem>>, vector<1x1x8x8xf32>
    %45 = vector.shape_cast %44 : vector<1x1x8x8xf32> to vector<8x8xf32>
    %46 = vector.shape_cast %43 : vector<8x8xf32> to vector<1x1x8x8xf32>
    tpu.vector_store %arg7[%c0_27, %c1, %c0_28, %c0_29], %46 {strides = array<i32>} : memref<1x4x8x8xf32, #tpu.memory_space<vmem>>, vector<1x1x8x8xf32>,
    %47 = vector.extract_strided_slice %30 {offsets = [0, 40], sizes = [8, 8], strides = [1, 1]} : vector<8x96xf32> to vector<8x8xf32>
    %c0_30 = arith.constant 0 : index
    %c1_31 = arith.constant 1 : index
    %c0_32 = arith.constant 0 : index
    %c0_33 = arith.constant 0 : index
    %48 = vector.load %arg8[%c0_30, %c1_31, %c0_32, %c0_33] : memref<1x4x8x8xf32, #tpu.memory_space<vmem>>, vector<1x1x8x8xf32>
    %49 = vector.shape_cast %48 : vector<1x1x8x8xf32> to vector<8x8xf32>
    %50 = vector.shape_cast %47 : vector<8x8xf32> to vector<1x1x8x8xf32>
    tpu.vector_store %arg8[%c0_30, %c1_31, %c0_32, %c0_33], %50 {strides = array<i32>} : memref<1x4x8x8xf32, #tpu.memory_space<vmem>>, vector<1x1x8x8xf32>,
    %51 = vector.extract_strided_slice %30 {offsets = [0, 72], sizes = [8, 8], strides = [1, 1]} : vector<8x96xf32> to vector<8x8xf32>
    %c0_34 = arith.constant 0 : index
    %c1_35 = arith.constant 1 : index
    %c0_36 = arith.constant 0 : index
    %c0_37 = arith.constant 0 : index
    %52 = vector.load %arg9[%c0_34, %c1_35, %c0_36, %c0_37] : memref<1x4x8x8xf32, #tpu.memory_space<vmem>>, vector<1x1x8x8xf32>
    %53 = vector.shape_cast %52 : vector<1x1x8x8xf32> to vector<8x8xf32>
    %54 = vector.shape_cast %51 : vector<8x8xf32> to vector<1x1x8x8xf32>
    tpu.vector_store %arg9[%c0_34, %c1_35, %c0_36, %c0_37], %54 {strides = array<i32>} : memref<1x4x8x8xf32, #tpu.memory_space<vmem>>, vector<1x1x8x8xf32>,
    %55 = vector.extract_strided_slice %30 {offsets = [0, 16], sizes = [8, 8], strides = [1, 1]} : vector<8x96xf32> to vector<8x8xf32>
    %c0_38 = arith.constant 0 : index
    %c2 = arith.constant 2 : index
    %c0_39 = arith.constant 0 : index
    %c0_40 = arith.constant 0 : index
    %56 = vector.load %arg7[%c0_38, %c2, %c0_39, %c0_40] : memref<1x4x8x8xf32, #tpu.memory_space<vmem>>, vector<1x1x8x8xf32>
    %57 = vector.shape_cast %56 : vector<1x1x8x8xf32> to vector<8x8xf32>
    %58 = vector.shape_cast %55 : vector<8x8xf32> to vector<1x1x8x8xf32>
    tpu.vector_store %arg7[%c0_38, %c2, %c0_39, %c0_40], %58 {strides = array<i32>} : memref<1x4x8x8xf32, #tpu.memory_space<vmem>>, vector<1x1x8x8xf32>,
    %59 = vector.extract_strided_slice %30 {offsets = [0, 48], sizes = [8, 8], strides = [1, 1]} : vector<8x96xf32> to vector<8x8xf32>
    %c0_41 = arith.constant 0 : index
    %c2_42 = arith.constant 2 : index
    %c0_43 = arith.constant 0 : index
    %c0_44 = arith.constant 0 : index
    %60 = vector.load %arg8[%c0_41, %c2_42, %c0_43, %c0_44] : memref<1x4x8x8xf32, #tpu.memory_space<vmem>>, vector<1x1x8x8xf32>
    %61 = vector.shape_cast %60 : vector<1x1x8x8xf32> to vector<8x8xf32>
    %62 = vector.shape_cast %59 : vector<8x8xf32> to vector<1x1x8x8xf32>
    tpu.vector_store %arg8[%c0_41, %c2_42, %c0_43, %c0_44], %62 {strides = array<i32>} : memref<1x4x8x8xf32, #tpu.memory_space<vmem>>, vector<1x1x8x8xf32>,
    %63 = vector.extract_strided_slice %30 {offsets = [0, 80], sizes = [8, 8], strides = [1, 1]} : vector<8x96xf32> to vector<8x8xf32>
    %c0_45 = arith.constant 0 : index
    %c2_46 = arith.constant 2 : index
    %c0_47 = arith.constant 0 : index
    %c0_48 = arith.constant 0 : index
    %64 = vector.load %arg9[%c0_45, %c2_46, %c0_47, %c0_48] : memref<1x4x8x8xf32, #tpu.memory_space<vmem>>, vector<1x1x8x8xf32>
    %65 = vector.shape_cast %64 : vector<1x1x8x8xf32> to vector<8x8xf32>
    %66 = vector.shape_cast %63 : vector<8x8xf32> to vector<1x1x8x8xf32>
    tpu.vector_store %arg9[%c0_45, %c2_46, %c0_47, %c0_48], %66 {strides = array<i32>} : memref<1x4x8x8xf32, #tpu.memory_space<vmem>>, vector<1x1x8x8xf32>,
    %67 = vector.extract_strided_slice %30 {offsets = [0, 24], sizes = [8, 8], strides = [1, 1]} : vector<8x96xf32> to vector<8x8xf32>
    %c0_49 = arith.constant 0 : index
    %c3 = arith.constant 3 : index
    %c0_50 = arith.constant 0 : index
    %c0_51 = arith.constant 0 : index
    %68 = vector.load %arg7[%c0_49, %c3, %c0_50, %c0_51] : memref<1x4x8x8xf32, #tpu.memory_space<vmem>>, vector<1x1x8x8xf32>
    %69 = vector.shape_cast %68 : vector<1x1x8x8xf32> to vector<8x8xf32>
    %70 = vector.shape_cast %67 : vector<8x8xf32> to vector<1x1x8x8xf32>
    tpu.vector_store %arg7[%c0_49, %c3, %c0_50, %c0_51], %70 {strides = array<i32>} : memref<1x4x8x8xf32, #tpu.memory_space<vmem>>, vector<1x1x8x8xf32>,
    %71 = vector.extract_strided_slice %30 {offsets = [0, 56], sizes = [8, 8], strides = [1, 1]} : vector<8x96xf32> to vector<8x8xf32>
    %c0_52 = arith.constant 0 : index
    %c3_53 = arith.constant 3 : index
    %c0_54 = arith.constant 0 : index
    %c0_55 = arith.constant 0 : index
    %72 = vector.load %arg8[%c0_52, %c3_53, %c0_54, %c0_55] : memref<1x4x8x8xf32, #tpu.memory_space<vmem>>, vector<1x1x8x8xf32>
    %73 = vector.shape_cast %72 : vector<1x1x8x8xf32> to vector<8x8xf32>
    %74 = vector.shape_cast %71 : vector<8x8xf32> to vector<1x1x8x8xf32>
    tpu.vector_store %arg8[%c0_52, %c3_53, %c0_54, %c0_55], %74 {strides = array<i32>} : memref<1x4x8x8xf32, #tpu.memory_space<vmem>>, vector<1x1x8x8xf32>,
    %75 = vector.extract_strided_slice %30 {offsets = [0, 88], sizes = [8, 8], strides = [1, 1]} : vector<8x96xf32> to vector<8x8xf32>
    %c0_56 = arith.constant 0 : index
    %c3_57 = arith.constant 3 : index
    %c0_58 = arith.constant 0 : index
    %c0_59 = arith.constant 0 : index
    %76 = vector.load %arg9[%c0_56, %c3_57, %c0_58, %c0_59] : memref<1x4x8x8xf32, #tpu.memory_space<vmem>>, vector<1x1x8x8xf32>
    %77 = vector.shape_cast %76 : vector<1x1x8x8xf32> to vector<8x8xf32>
    %78 = vector.shape_cast %75 : vector<8x8xf32> to vector<1x1x8x8xf32>
    tpu.vector_store %arg9[%c0_56, %c3_57, %c0_58, %c0_59], %78 {strides = array<i32>} : memref<1x4x8x8xf32, #tpu.memory_space<vmem>>, vector<1x1x8x8xf32>,
    return
  }
  func.func @transform_0(%arg0: i32, %arg1: i32) -> (i32, i32, i32) {
    %c0_i32 = arith.constant 0 : i32
    %c0_i32_0 = arith.constant 0 : i32
    return %arg0, %arg1, %c0_i32 : i32, i32, i32
  }
  func.func @transform_1(%arg0: i32, %arg1: i32) -> (i32, i32) {
    %c0_i32 = arith.constant 0 : i32
    %c0_i32_0 = arith.constant 0 : i32
    %c0_i32_1 = arith.constant 0 : i32
    return %c0_i32, %c0_i32_0 : i32, i32
  }
  func.func @transform_2(%arg0: i32, %arg1: i32) -> (i32, i32) {
    %c0_i32 = arith.constant 0 : i32
    %c0_i32_0 = arith.constant 0 : i32
    %c0_i32_1 = arith.constant 0 : i32
    return %c0_i32, %c0_i32_0 : i32, i32
  }
  func.func @transform_3(%arg0: i32, %arg1: i32) -> (i32, i32) {
    %c0_i32 = arith.constant 0 : i32
    %c0_i32_0 = arith.constant 0 : i32
    %c0_i32_1 = arith.constant 0 : i32
    return %c0_i32, %c0_i32_0 : i32, i32
  }
  func.func @transform_4(%arg0: i32, %arg1: i32) -> (i32, i32) {
    %c0_i32 = arith.constant 0 : i32
    %c0_i32_0 = arith.constant 0 : i32
    %c0_i32_1 = arith.constant 0 : i32
    return %c0_i32, %c0_i32_0 : i32, i32
  }
  func.func @transform_5(%arg0: i32, %arg1: i32) -> (i32, i32, i32, i32) {
    %c0_i32 = arith.constant 0 : i32
    %c0_i32_0 = arith.constant 0 : i32
    %c0_i32_1 = arith.constant 0 : i32
    return %arg0, %c0_i32, %arg1, %c0_i32_0 : i32, i32, i32, i32
  }
  func.func @transform_6(%arg0: i32, %arg1: i32) -> (i32, i32, i32, i32) {
    %c0_i32 = arith.constant 0 : i32
    %c0_i32_0 = arith.constant 0 : i32
    %c0_i32_1 = arith.constant 0 : i32
    return %arg0, %c0_i32, %arg1, %c0_i32_0 : i32, i32, i32, i32
  }
  func.func @transform_7(%arg0: i32, %arg1: i32) -> (i32, i32, i32, i32) {
    %c0_i32 = arith.constant 0 : i32
    %c0_i32_0 = arith.constant 0 : i32
    %c0_i32_1 = arith.constant 0 : i32
    return %arg0, %c0_i32, %arg1, %c0_i32_0 : i32, i32, i32, i32
  }
}

module attributes {stable_mosaic.version = 11 : i64} {
  func.func @qkv_kernel(%arg0: i32, %arg1: i32, %arg2: memref<1x8x32xf32, #tpu.memory_space<vmem>>, %arg3: memref<1x32xf32, #tpu.memory_space<vmem>>, %arg4: memref<1x32xf32, #tpu.memory_space<vmem>>, %arg5: memref<32x96xf32, #tpu.memory_space<vmem>>, %arg6: memref<1x96xf32, #tpu.memory_space<vmem>>, %arg7: memref<1x4x8x8xf32, #tpu.memory_space<vmem>>, %arg8: memref<1x4x8x8xf32, #tpu.memory_space<vmem>>, %arg9: memref<1x4x8x8xf32, #tpu.memory_space<vmem>>) attributes {dimension_semantics = [#tpu.dimension_semantics<parallel>, #tpu.dimension_semantics<parallel>], iteration_bounds = array<i64: 2, 1>, scalar_prefetch = 0 : i64, scratch_operands = 0 : i64, tpu.core_type = #tpu.core_type<tc>, window_params = [{transform_indices = @transform_0, window_bounds = array<i64: 1, 8, 32>}, {pipeline_mode = #tpu.pipeline_mode<synchronous>, transform_indices = @transform_1, window_bounds = array<i64: 1, 32>}, {pipeline_mode = #tpu.pipeline_mode<synchronous>, transform_indices = @transform_2, window_bounds = array<i64: 1, 32>}, {pipeline_mode = #tpu.pipeline_mode<synchronous>, transform_indices = @transform_3, window_bounds = array<i64: 32, 96>}, {pipeline_mode = #tpu.pipeline_mode<synchronous>, transform_indices = @transform_4, window_bounds = array<i64: 1, 96>}, {transform_indices = @transform_5, window_bounds = array<i64: 1, 4, 8, 8>}, {transform_indices = @transform_6, window_bounds = array<i64: 1, 4, 8, 8>}, {transform_indices = @transform_7, window_bounds = array<i64: 1, 4, 8, 8>}]} {
    %c0 = arith.constant 0 : index
    %c0_0 = arith.constant 0 : index
    %c0_1 = arith.constant 0 : index
    %0 = vector.load %arg2[%c0, %c0_0, %c0_1] : memref<1x8x32xf32, #tpu.memory_space<vmem>>, vector<1x8x32xf32>
    %1 = vector.shape_cast %0 : vector<1x8x32xf32> to vector<8x32xf32>
    %c0_2 = arith.constant 0 : index
    %c0_3 = arith.constant 0 : index
    %2 = vector.load %arg3[%c0_2, %c0_3] : memref<1x32xf32, #tpu.memory_space<vmem>>, vector<1x32xf32>
    %c0_4 = arith.constant 0 : index
    %c0_5 = arith.constant 0 : index
    %3 = vector.load %arg4[%c0_4, %c0_5] : memref<1x32xf32, #tpu.memory_space<vmem>>, vector<1x32xf32>
    %cst = arith.constant dense<0.000000e+00> : vector<8xf32>
    %4 = vector.multi_reduction <add>, %1, %cst [1] : vector<8x32xf32> to vector<8xf32>
    %5 = vector.shape_cast %4 : vector<8xf32> to vector<8x1xf32>
    %cst_6 = arith.constant 3.200000e+01 : f32
    %6 = vector.broadcast %cst_6 : f32 to vector<8x1xf32>
    %7 = arith.divf %5, %6 : vector<8x1xf32>
    %8 = vector.broadcast %7 : vector<8x1xf32> to vector<8x32xf32>
    %9 = arith.subf %1, %8 : vector<8x32xf32>
    %10 = arith.mulf %9, %9 : vector<8x32xf32>
    %cst_7 = arith.constant dense<0.000000e+00> : vector<8xf32>
    %11 = vector.multi_reduction <add>, %10, %cst_7 [1] : vector<8x32xf32> to vector<8xf32>
    %12 = vector.shape_cast %11 : vector<8xf32> to vector<8x1xf32>
    %cst_8 = arith.constant 3.200000e+01 : f32
    %13 = vector.broadcast %cst_8 : f32 to vector<8x1xf32>
    %14 = arith.divf %12, %13 : vector<8x1xf32>
    %15 = vector.broadcast %7 : vector<8x1xf32> to vector<8x32xf32>
    %16 = arith.subf %1, %15 : vector<8x32xf32>
    %cst_9 = arith.constant 9.99999974E-6 : f32
    %17 = vector.broadcast %cst_9 : f32 to vector<8x1xf32>
    %18 = arith.addf %14, %17 : vector<8x1xf32>
    %19 = math.rsqrt %18 : vector<8x1xf32>
    %20 = vector.broadcast %19 : vector<8x1xf32> to vector<8x32xf32>
    %21 = arith.mulf %16, %20 : vector<8x32xf32>
    %22 = vector.broadcast %2 : vector<1x32xf32> to vector<8x32xf32>
    %23 = arith.mulf %21, %22 : vector<8x32xf32>
    %24 = vector.broadcast %3 : vector<1x32xf32> to vector<8x32xf32>
    %25 = arith.addf %23, %24 : vector<8x32xf32>
    %c0_10 = arith.constant 0 : index
    %c0_11 = arith.constant 0 : index
    %26 = vector.load %arg5[%c0_10, %c0_11] : memref<32x96xf32, #tpu.memory_space<vmem>>, vector<32x96xf32>
    %cst_12 = arith.constant dense<0.000000e+00> : vector<8x96xf32>
    %27 = tpu.matmul %25, %26, %cst_12 {dimension_numbers = #tpu.dot_dimension_numbers<[1], [0], [0], [1], [0, 0, 1, 1], [], []>} : vector<8x32xf32>, vector<32x96xf32>, vector<8x96xf32> -> vector<8x96xf32>
    %c0_13 = arith.constant 0 : index
    %c0_14 = arith.constant 0 : index
    %28 = vector.load %arg6[%c0_13, %c0_14] : memref<1x96xf32, #tpu.memory_space<vmem>>, vector<1x96xf32>
    %29 = vector.broadcast %28 : vector<1x96xf32> to vector<8x96xf32>
    %30 = arith.addf %27, %29 : vector<8x96xf32>
    %31 = vector.extract_strided_slice %30 {offsets = [0, 0], sizes = [8, 8], strides = [1, 1]} : vector<8x96xf32> to vector<8x8xf32>
    %c0_15 = arith.constant 0 : index
    %c0_16 = arith.constant 0 : index
    %c0_17 = arith.constant 0 : index
    %c0_18 = arith.constant 0 : index
    %32 = vector.load %arg7[%c0_15, %c0_16, %c0_17, %c0_18] : memref<1x4x8x8xf32, #tpu.memory_space<vmem>>, vector<1x1x8x8xf32>
    %33 = vector.shape_cast %32 : vector<1x1x8x8xf32> to vector<8x8xf32>
    %34 = vector.shape_cast %31 : vector<8x8xf32> to vector<1x1x8x8xf32>
    tpu.vector_store %arg7[%c0_15, %c0_16, %c0_17, %c0_18], %34 {strides = array<i32>} : memref<1x4x8x8xf32, #tpu.memory_space<vmem>>, vector<1x1x8x8xf32>,
    %35 = vector.extract_strided_slice %30 {offsets = [0, 32], sizes = [8, 8], strides = [1, 1]} : vector<8x96xf32> to vector<8x8xf32>
    %c0_19 = arith.constant 0 : index
    %c0_20 = arith.constant 0 : index
    %c0_21 = arith.constant 0 : index
    %c0_22 = arith.constant 0 : index
    %36 = vector.load %arg8[%c0_19, %c0_20, %c0_21, %c0_22] : memref<1x4x8x8xf32, #tpu.memory_space<vmem>>, vector<1x1x8x8xf32>
    %37 = vector.shape_cast %36 : vector<1x1x8x8xf32> to vector<8x8xf32>
    %38 = vector.shape_cast %35 : vector<8x8xf32> to vector<1x1x8x8xf32>
    tpu.vector_store %arg8[%c0_19, %c0_20, %c0_21, %c0_22], %38 {strides = array<i32>} : memref<1x4x8x8xf32, #tpu.memory_space<vmem>>, vector<1x1x8x8xf32>,
    %39 = vector.extract_strided_slice %30 {offsets = [0, 64], sizes = [8, 8], strides = [1, 1]} : vector<8x96xf32> to vector<8x8xf32>
    %c0_23 = arith.constant 0 : index
    %c0_24 = arith.constant 0 : index
    %c0_25 = arith.constant 0 : index
    %c0_26 = arith.constant 0 : index
    %40 = vector.load %arg9[%c0_23, %c0_24, %c0_25, %c0_26] : memref<1x4x8x8xf32, #tpu.memory_space<vmem>>, vector<1x1x8x8xf32>
    %41 = vector.shape_cast %40 : vector<1x1x8x8xf32> to vector<8x8xf32>
    %42 = vector.shape_cast %39 : vector<8x8xf32> to vector<1x1x8x8xf32>
    tpu.vector_store %arg9[%c0_23, %c0_24, %c0_25, %c0_26], %42 {strides = array<i32>} : memref<1x4x8x8xf32, #tpu.memory_space<vmem>>, vector<1x1x8x8xf32>,
    %43 = vector.extract_strided_slice %30 {offsets = [0, 8], sizes = [8, 8], strides = [1, 1]} : vector<8x96xf32> to vector<8x8xf32>
    %c0_27 = arith.constant 0 : index
    %c1 = arith.constant 1 : index
    %c0_28 = arith.constant 0 : index
    %c0_29 = arith.constant 0 : index
    %44 = vector.load %arg7[%c0_27, %c1, %c0_28, %c0_29] : memref<1x4x8x8xf32, #tpu.memory_space<vmem>>, vector<1x1x8x8xf32>
    %45 = vector.shape_cast %44 : vector<1x1x8x8xf32> to vector<8x8xf32>
    %46 = vector.shape_cast %43 : vector<8x8xf32> to vector<1x1x8x8xf32>
    tpu.vector_store %arg7[%c0_27, %c1, %c0_28, %c0_29], %46 {strides = array<i32>} : memref<1x4x8x8xf32, #tpu.memory_space<vmem>>, vector<1x1x8x8xf32>,
    %47 = vector.extract_strided_slice %30 {offsets = [0, 40], sizes = [8, 8], strides = [1, 1]} : vector<8x96xf32> to vector<8x8xf32>
    %c0_30 = arith.constant 0 : index
    %c1_31 = arith.constant 1 : index
    %c0_32 = arith.constant 0 : index
    %c0_33 = arith.constant 0 : index
    %48 = vector.load %arg8[%c0_30, %c1_31, %c0_32, %c0_33] : memref<1x4x8x8xf32, #tpu.memory_space<vmem>>, vector<1x1x8x8xf32>
    %49 = vector.shape_cast %48 : vector<1x1x8x8xf32> to vector<8x8xf32>
    %50 = vector.shape_cast %47 : vector<8x8xf32> to vector<1x1x8x8xf32>
    tpu.vector_store %arg8[%c0_30, %c1_31, %c0_32, %c0_33], %50 {strides = array<i32>} : memref<1x4x8x8xf32, #tpu.memory_space<vmem>>, vector<1x1x8x8xf32>,
    %51 = vector.extract_strided_slice %30 {offsets = [0, 72], sizes = [8, 8], strides = [1, 1]} : vector<8x96xf32> to vector<8x8xf32>
    %c0_34 = arith.constant 0 : index
    %c1_35 = arith.constant 1 : index
    %c0_36 = arith.constant 0 : index
    %c0_37 = arith.constant 0 : index
    %52 = vector.load %arg9[%c0_34, %c1_35, %c0_36, %c0_37] : memref<1x4x8x8xf32, #tpu.memory_space<vmem>>, vector<1x1x8x8xf32>
    %53 = vector.shape_cast %52 : vector<1x1x8x8xf32> to vector<8x8xf32>
    %54 = vector.shape_cast %51 : vector<8x8xf32> to vector<1x1x8x8xf32>
    tpu.vector_store %arg9[%c0_34, %c1_35, %c0_36, %c0_37], %54 {strides = array<i32>} : memref<1x4x8x8xf32, #tpu.memory_space<vmem>>, vector<1x1x8x8xf32>,
    %55 = vector.extract_strided_slice %30 {offsets = [0, 16], sizes = [8, 8], strides = [1, 1]} : vector<8x96xf32> to vector<8x8xf32>
    %c0_38 = arith.constant 0 : index
    %c2 = arith.constant 2 : index
    %c0_39 = arith.constant 0 : index
    %c0_40 = arith.constant 0 : index
    %56 = vector.load %arg7[%c0_38, %c2, %c0_39, %c0_40] : memref<1x4x8x8xf32, #tpu.memory_space<vmem>>, vector<1x1x8x8xf32>
    %57 = vector.shape_cast %56 : vector<1x1x8x8xf32> to vector<8x8xf32>
    %58 = vector.shape_cast %55 : vector<8x8xf32> to vector<1x1x8x8xf32>
    tpu.vector_store %arg7[%c0_38, %c2, %c0_39, %c0_40], %58 {strides = array<i32>} : memref<1x4x8x8xf32, #tpu.memory_space<vmem>>, vector<1x1x8x8xf32>,
    %59 = vector.extract_strided_slice %30 {offsets = [0, 48], sizes = [8, 8], strides = [1, 1]} : vector<8x96xf32> to vector<8x8xf32>
    %c0_41 = arith.constant 0 : index
    %c2_42 = arith.constant 2 : index
    %c0_43 = arith.constant 0 : index
    %c0_44 = arith.constant 0 : index
    %60 = vector.load %arg8[%c0_41, %c2_42, %c0_43, %c0_44] : memref<1x4x8x8xf32, #tpu.memory_space<vmem>>, vector<1x1x8x8xf32>
    %61 = vector.shape_cast %60 : vector<1x1x8x8xf32> to vector<8x8xf32>
    %62 = vector.shape_cast %59 : vector<8x8xf32> to vector<1x1x8x8xf32>
    tpu.vector_store %arg8[%c0_41, %c2_42, %c0_43, %c0_44], %62 {strides = array<i32>} : memref<1x4x8x8xf32, #tpu.memory_space<vmem>>, vector<1x1x8x8xf32>,
    %63 = vector.extract_strided_slice %30 {offsets = [0, 80], sizes = [8, 8], strides = [1, 1]} : vector<8x96xf32> to vector<8x8xf32>
    %c0_45 = arith.constant 0 : index
    %c2_46 = arith.constant 2 : index
    %c0_47 = arith.constant 0 : index
    %c0_48 = arith.constant 0 : index
    %64 = vector.load %arg9[%c0_45, %c2_46, %c0_47, %c0_48] : memref<1x4x8x8xf32, #tpu.memory_space<vmem>>, vector<1x1x8x8xf32>
    %65 = vector.shape_cast %64 : vector<1x1x8x8xf32> to vector<8x8xf32>
    %66 = vector.shape_cast %63 : vector<8x8xf32> to vector<1x1x8x8xf32>
    tpu.vector_store %arg9[%c0_45, %c2_46, %c0_47, %c0_48], %66 {strides = array<i32>} : memref<1x4x8x8xf32, #tpu.memory_space<vmem>>, vector<1x1x8x8xf32>,
    %67 = vector.extract_strided_slice %30 {offsets = [0, 24], sizes = [8, 8], strides = [1, 1]} : vector<8x96xf32> to vector<8x8xf32>
    %c0_49 = arith.constant 0 : index
    %c3 = arith.constant 3 : index
    %c0_50 = arith.constant 0 : index
    %c0_51 = arith.constant 0 : index
    %68 = vector.load %arg7[%c0_49, %c3, %c0_50, %c0_51] : memref<1x4x8x8xf32, #tpu.memory_space<vmem>>, vector<1x1x8x8xf32>
    %69 = vector.shape_cast %68 : vector<1x1x8x8xf32> to vector<8x8xf32>
    %70 = vector.shape_cast %67 : vector<8x8xf32> to vector<1x1x8x8xf32>
    tpu.vector_store %arg7[%c0_49, %c3, %c0_50, %c0_51], %70 {strides = array<i32>} : memref<1x4x8x8xf32, #tpu.memory_space<vmem>>, vector<1x1x8x8xf32>,
    %71 = vector.extract_strided_slice %30 {offsets = [0, 56], sizes = [8, 8], strides = [1, 1]} : vector<8x96xf32> to vector<8x8xf32>
    %c0_52 = arith.constant 0 : index
    %c3_53 = arith.constant 3 : index
    %c0_54 = arith.constant 0 : index
    %c0_55 = arith.constant 0 : index
    %72 = vector.load %arg8[%c0_52, %c3_53, %c0_54, %c0_55] : memref<1x4x8x8xf32, #tpu.memory_space<vmem>>, vector<1x1x8x8xf32>
    %73 = vector.shape_cast %72 : vector<1x1x8x8xf32> to vector<8x8xf32>
    %74 = vector.shape_cast %71 : vector<8x8xf32> to vector<1x1x8x8xf32>
    tpu.vector_store %arg8[%c0_52, %c3_53, %c0_54, %c0_55], %74 {strides = array<i32>} : memref<1x4x8x8xf32, #tpu.memory_space<vmem>>, vector<1x1x8x8xf32>,
    %75 = vector.extract_strided_slice %30 {offsets = [0, 88], sizes = [8, 8], strides = [1, 1]} : vector<8x96xf32> to vector<8x8xf32>
    %c0_56 = arith.constant 0 : index
    %c3_57 = arith.constant 3 : index
    %c0_58 = arith.constant 0 : index
    %c0_59 = arith.constant 0 : index
    %76 = vector.load %arg9[%c0_56, %c3_57, %c0_58, %c0_59] : memref<1x4x8x8xf32, #tpu.memory_space<vmem>>, vector<1x1x8x8xf32>
    %77 = vector.shape_cast %76 : vector<1x1x8x8xf32> to vector<8x8xf32>
    %78 = vector.shape_cast %75 : vector<8x8xf32> to vector<1x1x8x8xf32>
    tpu.vector_store %arg9[%c0_56, %c3_57, %c0_58, %c0_59], %78 {strides = array<i32>} : memref<1x4x8x8xf32, #tpu.memory_space<vmem>>, vector<1x1x8x8xf32>,
    return
  }
  func.func @transform_0(%arg0: i32, %arg1: i32) -> (i32, i32, i32) {
    %c0_i32 = arith.constant 0 : i32
    %c0_i32_0 = arith.constant 0 : i32
    return %arg0, %arg1, %c0_i32 : i32, i32, i32
  }
  func.func @transform_1(%arg0: i32, %arg1: i32) -> (i32, i32) {
    %c0_i32 = arith.constant 0 : i32
    %c0_i32_0 = arith.constant 0 : i32
    %c0_i32_1 = arith.constant 0 : i32
    return %c0_i32, %c0_i32_0 : i32, i32
  }
  func.func @transform_2(%arg0: i32, %arg1: i32) -> (i32, i32) {
    %c0_i32 = arith.constant 0 : i32
    %c0_i32_0 = arith.constant 0 : i32
    %c0_i32_1 = arith.constant 0 : i32
    return %c0_i32, %c0_i32_0 : i32, i32
  }
  func.func @transform_3(%arg0: i32, %arg1: i32) -> (i32, i32) {
    %c0_i32 = arith.constant 0 : i32
    %c0_i32_0 = arith.constant 0 : i32
    %c0_i32_1 = arith.constant 0 : i32
    return %c0_i32, %c0_i32_0 : i32, i32
  }
  func.func @transform_4(%arg0: i32, %arg1: i32) -> (i32, i32) {
    %c0_i32 = arith.constant 0 : i32
    %c0_i32_0 = arith.constant 0 : i32
    %c0_i32_1 = arith.constant 0 : i32
    return %c0_i32, %c0_i32_0 : i32, i32
  }
  func.func @transform_5(%arg0: i32, %arg1: i32) -> (i32, i32, i32, i32) {
    %c0_i32 = arith.constant 0 : i32
    %c0_i32_0 = arith.constant 0 : i32
    %c0_i32_1 = arith.constant 0 : i32
    return %arg0, %c0_i32, %arg1, %c0_i32_0 : i32, i32, i32, i32
  }
  func.func @transform_6(%arg0: i32, %arg1: i32) -> (i32, i32, i32, i32) {
    %c0_i32 = arith.constant 0 : i32
    %c0_i32_0 = arith.constant 0 : i32
    %c0_i32_1 = arith.constant 0 : i32
    return %arg0, %c0_i32, %arg1, %c0_i32_0 : i32, i32, i32, i32
  }
  func.func @transform_7(%arg0: i32, %arg1: i32) -> (i32, i32, i32, i32) {
    %c0_i32 = arith.constant 0 : i32
    %c0_i32_0 = arith.constant 0 : i32
    %c0_i32_1 = arith.constant 0 : i32
    return %arg0, %c0_i32, %arg1, %c0_i32_0 : i32, i32, i32, i32
  }
}

</mosaic_0001>

<llo_original>
// kernel: tpu_custom_call.1
$region0: #{tpu_custom_call.1}
  #allocation0 [shape = 'u32[]', space=smem, size = 0x4, offset = 0x4, fixed_abs, tag = 'smem constant byte address 0x4 - core index']
  #allocation1 [shape = 'u32[144,128]{1,0:T(1,128)}', space=vmem, size = 0x12000, scoped, tag = 'internal scratch']
  %s0 = inlined_call_operand.hbm [shape: f32[2,8,32], index: 0, kind: input, shape index: {}]
  %s1 = inlined_call_operand.vmem [shape: f32[1,32], index: 1, kind: input, shape index: {}]
  %s2 = inlined_call_operand.vmem [shape: f32[1,32], index: 2, kind: input, shape index: {}]
  %s3 = inlined_call_operand.hbm [shape: f32[32,96], index: 3, kind: input, shape index: {}]
  %s4 = inlined_call_operand.vmem [shape: f32[1,96], index: 4, kind: input, shape index: {}]
  %s5 = inlined_call_operand.hbm [shape: f32[2,4,8,8], index: 5, kind: output, shape index: {0}]
  %s6 = inlined_call_operand.hbm [shape: f32[2,4,8,8], index: 6, kind: output, shape index: {1}]
  %s7 = inlined_call_operand.hbm [shape: f32[2,4,8,8], index: 7, kind: output, shape index: {2}]
  %8 = xla_tuple %s5, %s6, %s7
  %s9 = sld [smem:[#allocation0]]
  $region77: #{tpu_custom_call.1} parent=0
    _
  %s11 = ssub.s32 1, %s9
  %s12 = scalar_select 0, %s11, %s9
  $region1: #{tpu_custom_call.1} parent=0
    #allocation2 [shape = 'u8[8192]{0}', space=vmem, size = 0x2000, scoped, tag = 'input window, operand 0']
    #allocation3 [shape = 's32[2]{0}', space=sflag, size = 0x8, scoped, tag = 'scoped memory for tpu_custom_call.1']
    #allocation4 [shape = 's32[2]{0}', space=sflag, size = 0x8, scoped, tag = 'scoped memory for tpu_custom_call.1']
    #allocation5 [shape = 'u8[16384]{0}', space=vmem, size = 0x4000, scoped, tag = 'input window, operand 3, single buffered']
    #allocation6 [shape = 's32[1]{0}', space=sflag, size = 0x4, scoped, tag = 'scoped memory for tpu_custom_call.1']
    #allocation7 [shape = 'u8[32768]{0}', space=vmem, size = 0x8000, scoped, tag = 'output window, operand 0']
    #allocation8 [shape = 'u8[32768]{0}', space=vmem, size = 0x8000, scoped, tag = 'output window, operand 1']
    #allocation9 [shape = 's32[2]{0}', space=sflag, size = 0x8, scoped, tag = 'scoped memory for tpu_custom_call.1']
    #allocation10 [shape = 'u8[32768]{0}', space=vmem, size = 0x8000, scoped, tag = 'output window, operand 2']
    %13 = vsyncpa [#allocation3], 0
    %s14 = scalar_lea.sflag [#allocation3], 1
    %15 = vsyncpa %s14, 0
    %16 = vsyncpa [#allocation6], 0
    %17 = vsyncpa [#allocation4], 0
    %s18 = scalar_lea.sflag [#allocation4], 1
    %19 = vsyncpa %s18, 0
    %20 = vsyncpa [#allocation9], 0
    %s21 = scalar_lea.sflag [#allocation9], 1
    %22 = vsyncpa %s21, 0
    loop: start=0, step=1, limit=4
    $region2: #{tpu_custom_call.1} parent=1 // loop_pre_header
      _
    $region3: #{tpu_custom_call.1} parent=1 // loop_header
      %s24 = sphi 0, %s28
      %p25 = scmp.ge.s32.totalorder %s24, 4
      %s31 = sphi 0, %s43
      %s32 = sphi 0, %s39
      %s33 = sphi 0, %s31
      %s34 = sphi 0, %s32
      %s35 = sphi 0, %s33
      %s36 = sphi 0, %s34
      %s48 = sphi 0, %s50
      %s51 = sphi 0, %s48
      %s52 = sphi 0, %s51
      %s68 = sphi 0, %s52
      %s72 = sphi 0, %s72
      %s74 = sphi 0, %s72
      %s75 = sphi 0, %s74
      %s89 = sphi 0, %s75
      %s93 = sphi 0, %s93
      %s95 = sphi 0, %s93
      %s96 = sphi 0, %s95
      %s110 = sphi 0, %s96
      %s114 = sphi 0, %s114
      %s116 = sphi 0, %s114
      %s117 = sphi 0, %s116
      %s131 = sphi 0, %s117
      %s135 = sphi 0, %s135
      %s137 = sphi 0, %s135
      %s138 = sphi 0, %s137
      %s152 = sphi 0, %s138
      %s160 = sphi 0, %s162
      %s163 = sphi 0, %s160
      %s164 = sphi 0, %s163
      %s180 = sphi 0, %s164
      %s188 = sphi 0, %s190
      %s191 = sphi 0, %s188
      %s192 = sphi 0, %s191
      %s208 = sphi 0, %s192
      %s216 = sphi 0, %s218
      %s219 = sphi 0, %s216
      %s220 = sphi 0, %s219
      %s236 = sphi 0, %s220
    $region4: #{tpu_custom_call.1} parent=1 // loop_header_branch
      %27 = sbr.rel (%p25) target = $region8
    $region5: #{tpu_custom_call.1} parent=1 // loop_body
      %s29 = ssub.s32 %s24, 1
      %s30 = ssub.s32 %s24, 2
      %s37 = sadd.s32 1, %s32
      %p38 = scmp.ge.s32.totalorder %s37, 1
      %s39 = scalar_select %p38, 0, %s37
      %s40 = sadd.s32 1, %s31
      %s41 = scalar_select %p38, %s40, %s31
      %p42 = scmp.ge.s32.totalorder %s41, 2
      %s43 = scalar_select %p42, 0, %s41
      %s44 = ssub.s32 %s31, %s43
      %s45 = ssub.s32 %s32, %s39
      %s46 = sor.u32 %s44, %s45
      %p47 = scmp.eq.s32.totalorder %s46, 0
      %s49 = sadd.s32 %s48, 1
      %s50 = scalar_select %p47, %s48, %s49
      %p53 = pneg %p47
      %p54 = scmp.eq.s32.totalorder %s24, 1
      %p55 = por %p53, %p54
      %p56 = scmp.ne.s32.totalorder %s48, %s51
      %p57 = scmp.eq.s32.totalorder %s24, 0
      %p58 = por %p56, %p57
      %p59 = scmp.ne.s32.totalorder %s48, %s51
      %p60 = scmp.eq.s32.totalorder %s29, 1
      %p61 = por %p59, %p60
      %p62 = scmp.ne.s32.totalorder %s51, %s52
      %p63 = scmp.eq.s32.totalorder %s29, 0
      %p64 = por %p62, %p63
      %p65 = scmp.ne.s32.totalorder %s51, %s52
      %p66 = scmp.eq.s32.totalorder %s30, 1
      %p67 = por %p65, %p66
      %p69 = scmp.ne.s32.totalorder %s52, %s68
      %p70 = scmp.eq.s32.totalorder %s30, 0
      %p71 = por %p69, %p70
      %s73 = sadd.s32 %s72, 1
      %p76 = scmp.eq.s32.totalorder %s24, 1
      %p77 = scmp.ne.s32.totalorder %s72, %s74
      %p78 = scmp.eq.s32.totalorder %s24, 0
      %p79 = por %p77, %p78
      %p80 = scmp.ne.s32.totalorder %s72, %s74
      %p81 = scmp.eq.s32.totalorder %s29, 1
      %p82 = por %p80, %p81
      %p83 = scmp.ne.s32.totalorder %s74, %s75
      %p84 = scmp.eq.s32.totalorder %s29, 0
      %p85 = por %p83, %p84
      %p86 = scmp.ne.s32.totalorder %s74, %s75
      %p87 = scmp.eq.s32.totalorder %s30, 1
      %p88 = por %p86, %p87
      %p90 = scmp.ne.s32.totalorder %s75, %s89
      %p91 = scmp.eq.s32.totalorder %s30, 0
      %p92 = por %p90, %p91
      %s94 = sadd.s32 %s93, 1
      %p97 = scmp.eq.s32.totalorder %s24, 1
      %p98 = scmp.ne.s32.totalorder %s93, %s95
      %p99 = scmp.eq.s32.totalorder %s24, 0
      %p100 = por %p98, %p99
      %p101 = scmp.ne.s32.totalorder %s93, %s95
      %p102 = scmp.eq.s32.totalorder %s29, 1
      %p103 = por %p101, %p102
      %p104 = scmp.ne.s32.totalorder %s95, %s96
      %p105 = scmp.eq.s32.totalorder %s29, 0
      %p106 = por %p104, %p105
      %p107 = scmp.ne.s32.totalorder %s95, %s96
      %p108 = scmp.eq.s32.totalorder %s30, 1
      %p109 = por %p107, %p108
      %p111 = scmp.ne.s32.totalorder %s96, %s110
      %p112 = scmp.eq.s32.totalorder %s30, 0
      %p113 = por %p111, %p112
      %s115 = sadd.s32 %s114, 1
      %p118 = scmp.eq.s32.totalorder %s24, 1
      %p119 = scmp.ne.s32.totalorder %s114, %s116
      %p120 = scmp.eq.s32.totalorder %s24, 0
      %p121 = por %p119, %p120
      %p122 = scmp.ne.s32.totalorder %s114, %s116
      %p123 = scmp.eq.s32.totalorder %s29, 1
      %p124 = por %p122, %p123
      %p125 = scmp.ne.s32.totalorder %s116, %s117
      %p126 = scmp.eq.s32.totalorder %s29, 0
      %p127 = por %p125, %p126
      %p128 = scmp.ne.s32.totalorder %s116, %s117
      %p129 = scmp.eq.s32.totalorder %s30, 1
      %p130 = por %p128, %p129
      %p132 = scmp.ne.s32.totalorder %s117, %s131
      %p133 = scmp.eq.s32.totalorder %s30, 0
      %p134 = por %p132, %p133
      %s136 = sadd.s32 %s135, 1
      %p139 = scmp.eq.s32.totalorder %s24, 1
      %p140 = scmp.ne.s32.totalorder %s135, %s137
      %p141 = scmp.eq.s32.totalorder %s24, 0
      %p142 = por %p140, %p141
      %p143 = scmp.ne.s32.totalorder %s135, %s137
      %p144 = scmp.eq.s32.totalorder %s29, 1
      %p145 = por %p143, %p144
      %p146 = scmp.ne.s32.totalorder %s137, %s138
      %p147 = scmp.eq.s32.totalorder %s29, 0
      %p148 = por %p146, %p147
      %p149 = scmp.ne.s32.totalorder %s137, %s138
      %p150 = scmp.eq.s32.totalorder %s30, 1
      %p151 = por %p149, %p150
      %p153 = scmp.ne.s32.totalorder %s138, %s152
      %p154 = scmp.eq.s32.totalorder %s30, 0
      %p155 = por %p153, %p154
      %s156 = ssub.s32 %s31, %s43
      %s157 = ssub.s32 %s32, %s39
      %s158 = sor.u32 %s156, %s157
      %p159 = scmp.eq.s32.totalorder %s158, 0
      %s161 = sadd.s32 %s160, 1
      %s162 = scalar_select %p159, %s160, %s161
      %p165 = pneg %p159
      %p166 = scmp.eq.s32.totalorder %s24, 1
      %p167 = por %p165, %p166
      %p168 = scmp.ne.s32.totalorder %s160, %s163
      %p169 = scmp.eq.s32.totalorder %s24, 0
      %p170 = por %p168, %p169
      %p171 = scmp.ne.s32.totalorder %s160, %s163
      %p172 = scmp.eq.s32.totalorder %s29, 1
      %p173 = por %p171, %p172
      %p174 = scmp.ne.s32.totalorder %s163, %s164
      %p175 = scmp.eq.s32.totalorder %s29, 0
      %p176 = por %p174, %p175
      %p177 = scmp.ne.s32.totalorder %s163, %s164
      %p178 = scmp.eq.s32.totalorder %s30, 1
      %p179 = por %p177, %p178
      %p181 = scmp.ne.s32.totalorder %s164, %s180
      %p182 = scmp.eq.s32.totalorder %s30, 0
      %p183 = por %p181, %p182
      %s184 = ssub.s32 %s31, %s43
      %s185 = ssub.s32 %s32, %s39
      %s186 = sor.u32 %s184, %s185
      %p187 = scmp.eq.s32.totalorder %s186, 0
      %s189 = sadd.s32 %s188, 1
      %s190 = scalar_select %p187, %s188, %s189
      %p193 = pneg %p187
      %p194 = scmp.eq.s32.totalorder %s24, 1
      %p195 = por %p193, %p194
      %p196 = scmp.ne.s32.totalorder %s188, %s191
      %p197 = scmp.eq.s32.totalorder %s24, 0
      %p198 = por %p196, %p197
      %p199 = scmp.ne.s32.totalorder %s188, %s191
      %p200 = scmp.eq.s32.totalorder %s29, 1
      %p201 = por %p199, %p200
      %p202 = scmp.ne.s32.totalorder %s191, %s192
      %p203 = scmp.eq.s32.totalorder %s29, 0
      %p204 = por %p202, %p203
      %p205 = scmp.ne.s32.totalorder %s191, %s192
      %p206 = scmp.eq.s32.totalorder %s30, 1
      %p207 = por %p205, %p206
      %p209 = scmp.ne.s32.totalorder %s192, %s208
      %p210 = scmp.eq.s32.totalorder %s30, 0
      %p211 = por %p209, %p210
      %s212 = ssub.s32 %s31, %s43
      %s213 = ssub.s32 %s32, %s39
      %s214 = sor.u32 %s212, %s213
      %p215 = scmp.eq.s32.totalorder %s214, 0
      %s217 = sadd.s32 %s216, 1
      %s218 = scalar_select %p215, %s216, %s217
      %p221 = pneg %p215
      %p222 = scmp.eq.s32.totalorder %s24, 1
      %p223 = por %p221, %p222
      %p224 = scmp.ne.s32.totalorder %s216, %s219
      %p225 = scmp.eq.s32.totalorder %s24, 0
      %p226 = por %p224, %p225
      %p227 = scmp.ne.s32.totalorder %s216, %s219
      %p228 = scmp.eq.s32.totalorder %s29, 1
      %p229 = por %p227, %p228
      %p230 = scmp.ne.s32.totalorder %s219, %s220
      %p231 = scmp.eq.s32.totalorder %s29, 0
      %p232 = por %p230, %p231
      %p233 = scmp.ne.s32.totalorder %s219, %s220
      %p234 = scmp.eq.s32.totalorder %s30, 1
      %p235 = por %p233, %p234
      %p237 = scmp.ne.s32.totalorder %s220, %s236
      %p238 = scmp.eq.s32.totalorder %s30, 0
      %p239 = por %p237, %p238
      %p240 = scmp.le.s32.totalorder 1, %s24
      %p241 = scmp.lt.s32.totalorder %s24, 3
      %p242 = pnand %p240, %p241
      %p243 = pneg %p242
      // Predicated region
      $region9: #{tpu_custom_call.1} parent=5 // pred_check
        _
      $region10: #{tpu_custom_call.1} parent=5 // pred_check_branch
        %245 = sbr.rel (%p242) target = $region12
      $region11: #{tpu_custom_call.1} parent=5 // pred_region
        %s246 = ssub.s32 %s24, 1
        // Predicated region
        $region13: #{tpu_custom_call.1} parent=11 // pred_check
          %p247 = pneg %p85
        $region14: #{tpu_custom_call.1} parent=11 // pred_check_branch
          %249 = sbr.rel (%p247) target = $region16
        $region15: #{tpu_custom_call.1} parent=11 // pred_region
          _
        $region16: #{tpu_custom_call.1} parent=11 // pred_fallthru
          _
        // Predicated region
        $region17: #{tpu_custom_call.1} parent=11 // pred_check
          %p250 = pneg %p106
        $region18: #{tpu_custom_call.1} parent=11 // pred_check_branch
          %252 = sbr.rel (%p250) target = $region20
        $region19: #{tpu_custom_call.1} parent=11 // pred_region
          _
        $region20: #{tpu_custom_call.1} parent=11 // pred_fallthru
          _
        // Predicated region
        $region21: #{tpu_custom_call.1} parent=11 // pred_check
          %p253 = pneg %p127
        $region22: #{tpu_custom_call.1} parent=11 // pred_check_branch
          %255 = sbr.rel (%p253) target = $region24
        $region23: #{tpu_custom_call.1} parent=11 // pred_region
          %s257 = ssub.s32 512, 512
          %258 = vsyncadd [#allocation6], %s257
          %s259 = sshll.u32 [#allocation5], 4
          %s260 = int_to_ptr.vmem [resolvable:$true] %s259
          %265 = dma.hbm_to_vmem [thread:$0]  %s3, 512, %s260, [#allocation6], 128, 128, 8
        $region24: #{tpu_custom_call.1} parent=11 // pred_fallthru
          _
        // Predicated region
        $region25: #{tpu_custom_call.1} parent=11 // pred_check
          %p266 = pneg %p148
        $region26: #{tpu_custom_call.1} parent=11 // pred_check_branch
          %268 = sbr.rel (%p266) target = $region28
        $region27: #{tpu_custom_call.1} parent=11 // pred_region
          _
        $region28: #{tpu_custom_call.1} parent=11 // pred_fallthru
          _
      $region12: #{tpu_custom_call.1} parent=5 // pred_fallthru
        _
      %p269 = scmp.lt.s32.totalorder %s24, 2
      // Predicated region
      $region29: #{tpu_custom_call.1} parent=5 // pred_check
        %p270 = pneg %p269
      $region30: #{tpu_custom_call.1} parent=5 // pred_check_branch
        %272 = sbr.rel (%p270) target = $region32
      $region31: #{tpu_custom_call.1} parent=5 // pred_region
        // Predicated region
        $region33: #{tpu_custom_call.1} parent=31 // pred_check
          %p273 = pneg %p58
        $region34: #{tpu_custom_call.1} parent=31 // pred_check_branch
          %275 = sbr.rel (%p273) target = $region36
        $region35: #{tpu_custom_call.1} parent=31 // pred_region
          %s276 = sand.u32 %s48, 1
          %s277 = scalar_lea.sflag [#allocation3], %s276
          %s278 = sand.u32 %s48, 1
          %s279 = smul.addr %s278, 8
          %s280 = scalar_lea.vmem [#allocation2], %s279
          %s282 = ssub.s32 128, 128
          %283 = vsyncadd %s277, %s282
          %s284 = sadd.s32 %s32, %s31
          %s285 = smul.addr %s284, 128
          %s286 = scalar_lea.hbm %s0, %s285
          %s288 = sshll.u32 %s280, 4
          %s289 = int_to_ptr.vmem [resolvable:$true] %s288
          %291 = dma.hbm_to_vmem [thread:$0]  %s286, 128, %s289, %s277
        $region36: #{tpu_custom_call.1} parent=31 // pred_fallthru
          _
      $region32: #{tpu_custom_call.1} parent=5 // pred_fallthru
        _
      %p292 = scmp.le.s32.totalorder 1, %s24
      %p293 = scmp.lt.s32.totalorder %s24, 3
      %p294 = pnand %p292, %p293
      %p295 = pneg %p294
      // Predicated region
      $region37: #{tpu_custom_call.1} parent=5 // pred_check
        _
      $region38: #{tpu_custom_call.1} parent=5 // pred_check_branch
        %297 = sbr.rel (%p294) target = $region40
      $region39: #{tpu_custom_call.1} parent=5 // pred_region
        %s298 = ssub.s32 %s24, 1
        %s299 = sand.u32 %s51, 1
        %s300 = scalar_lea.sflag [#allocation3], %s299
        %s301 = sand.u32 %s51, 1
        %s302 = smul.addr %s301, 8
        %s303 = scalar_lea.vmem [#allocation2], %s302
        // Predicated region
        $region41: #{tpu_custom_call.1} parent=39 // pred_check
          %p304 = pneg %p64
        $region42: #{tpu_custom_call.1} parent=39 // pred_check_branch
          %306 = sbr.rel (%p304) target = $region44
        $region43: #{tpu_custom_call.1} parent=39 // pred_region
          %307 = dma.done %s300, 128
        $region44: #{tpu_custom_call.1} parent=39 // pred_fallthru
          _
        // Predicated region
        $region45: #{tpu_custom_call.1} parent=39 // pred_check
          %p308 = pneg %p127
        $region46: #{tpu_custom_call.1} parent=39 // pred_check_branch
          %310 = sbr.rel (%p308) target = $region48
        $region47: #{tpu_custom_call.1} parent=39 // pred_region
          %311 = dma.done [#allocation6], 512
        $region48: #{tpu_custom_call.1} parent=39 // pred_fallthru
          _
        %s312 = sand.u32 %s51, 1
        %s313 = scalar_lea.sflag [#allocation3], %s312
        %s314 = sand.u32 %s51, 1
        %s315 = smul.addr %s314, 8
        %s316 = scalar_lea.vmem [#allocation2], %s315
        %p317 = pneg %p64
        %p318 = pneg %p61
        %p319 = pneg %p85
        %p320 = pneg %p82
        %p321 = pneg %p106
        %p322 = pneg %p103
        %p323 = pneg %p127
        %p324 = pneg %p124
        %p325 = pneg %p148
        %p326 = pneg %p145
        %p327 = pneg %p176
        %p328 = pneg %p173
        %s329 = sand.u32 %s163, 1
        %s330 = scalar_lea.sflag [#allocation4], %s329
        %s331 = sand.u32 %s163, 1
        %s332 = smul.addr %s331, 32
        %s333 = scalar_lea.vmem [#allocation7], %s332
        %p334 = pneg %p204
        %p335 = pneg %p201
        %s336 = sand.u32 %s29, 1
        %s337 = scalar_lea.sflag [#allocation9], %s336
        %s338 = sand.u32 %s191, 1
        %s339 = smul.addr %s338, 32
        %s340 = scalar_lea.vmem [#allocation8], %s339
        %p341 = pneg %p232
        %p342 = pneg %p229
        %s343 = sand.u32 %s29, 1
        %s344 = scalar_lea.sflag [#allocation9], %s343
        %s345 = sand.u32 %s219, 1
        %s346 = smul.addr %s345, 32
        %s347 = scalar_lea.vmem [#allocation10], %s346
        %v348 = vld [vmem:[%s303] sm:$0xff]
        %v349 = vld [vmem:[%s1] sm:$0x1]
        %v350 = vld [vmem:[%s2] sm:$0x1]
        %vm351 = vcmask 261120
        %v352 = vsel %vm351, %v348, 0.0
        %353 = vadd.xlane.f32.xlu0 %v352
        %v354 = vpop.xlane.xlu0 %353
        %v355 = vrcp.pop 32.0
        %v356 = vmul.f32 %v354, %v355
        %v357 = vsub.f32 %v348, %v356
        %v358 = vmul.f32 %v357, %v357
        %v359 = vsel %vm351, %v358, 0.0
        %360 = vadd.xlane.f32.xlu0 %v359
        %v361 = vpop.xlane.xlu0 %360
        %v362 = vmul.f32 %v361, %v355
        %v363 = vadd.f32 %v362, 1e-05
        %v364 = vrsqrt.pop %v363
        %v365 = vmul.f32 %v357, %v364
        %v367 = vlaneseq
        %v368 = vshrl.u32 %v367, 7
        %v369 = vsub.s32 0, %v368
        %v370 = vrot.slane %v349, %v369
        %v372 = vmul.f32 %v365, %v370
        %v374 = vlaneseq
        %v375 = vshrl.u32 %v374, 7
        %v376 = vsub.s32 0, %v375
        %v377 = vrot.slane %v350, %v376
        %v379 = vadd.f32 %v372, %v377
        %v380 = vld [vmem:[#allocation5] sm:$0xff]
        %v381 = vld [vmem:[#allocation5 + $0x8] sm:$0xff]
        %v382 = vld [vmem:[#allocation5 + $0x10] sm:$0xff]
        %v383 = vld [vmem:[#allocation5 + $0x18] sm:$0xff]
        %v384 = vld [vmem:[%s4] sm:$0x1]
        %v386 = vlaneseq
        %v387 = vshrl.u32 %v386, 7
        %v388 = vsub.s32 0, %v387
        %v389 = vrot.slane %v384, %v388
        %v392 = vsel %vm351, %v379, 0
        %394 = vmatprep.subr.mxu0 0.0
        %395 = vmatpush1.msra.mxu0 %v380
        %396 = vmatprep.subr.mxu0 0.0
        %397 = vmatpush1.msra.mxu0 %v381
        %398 = vmatprep.subr.mxu0 0.0
        %399 = vmatpush1.msra.mxu0 %v382
        %400 = vmatprep.subr.mxu0 0.0
        %401 = vmatpush1.msra.mxu0 %v383
        %402 = vmatprep.subr.mxu0 0.0
        %403 = vmatpush1.msra.mxu0 0.0
        %404 = vmatprep.subr.mxu0 0.0
        %405 = vmatpush1.msra.mxu0 0.0
        %406 = vmatprep.subr.mxu0 0.0
        %407 = vmatpush1.msra.mxu0 0.0
        %408 = vmatprep.subr.mxu0 0.0
        %409 = vmatpush1.msra.mxu0 0.0
        %410 = vmatprep.subr.mxu0 0.0
        %411 = vmatpush1.msra.mxu0 0.0
        %412 = vmatprep.subr.mxu0 0.0
        %413 = vmatpush1.msra.mxu0 0.0
        %414 = vmatprep.subr.mxu0 0.0
        %415 = vmatpush1.msra.mxu0 0.0
        %416 = vmatprep.subr.mxu0 0.0
        %417 = vmatpush1.msra.mxu0 0.0
        %418 = vmatprep.subr.mxu0 0.0
        %419 = vmatpush1.msra.mxu0 0.0
        %420 = vmatprep.subr.mxu0 0.0
        %421 = vmatpush1.msra.mxu0 0.0
        %422 = vmatprep.subr.mxu0 0.0
        %423 = vmatpush1.msra.mxu0 0.0
        %424 = vmatprep.subr.mxu0 0.0
        %425 = vmatpush1.msra.mxu0 0.0
        %426 = vmatprep.subr.mxu0 0.0
        %427 = vmatpush1.msra.mxu0 0.0
        %428 = vmatprep.subr.mxu0 0.0
        %429 = vmatpush1.msra.mxu0 0.0
        %430 = vmatprep.subr.mxu0 0.0
        %431 = vmatpush1.msra.mxu0 0.0
        %432 = vmatprep.subr.mxu0 0.0
        %433 = vmatpush1.msra.mxu0 0.0
        %434 = vmatprep.subr.mxu0 0.0
        %435 = vmatpush1.msra.mxu0 0.0
        %436 = vmatprep.subr.mxu0 0.0
        %437 = vmatpush1.msra.mxu0 0.0
        %438 = vmatprep.subr.mxu0 0.0
        %439 = vmatpush1.msra.mxu0 0.0
        %440 = vmatprep.subr.mxu0 0.0
        %441 = vmatpush1.msra.mxu0 0.0
        %442 = vmatprep.subr.mxu0 0.0
        %443 = vmatpush1.msra.mxu0 0.0
        %444 = vmatprep.subr.mxu0 0.0
        %445 = vmatpush1.msra.mxu0 0.0
        %446 = vmatprep.subr.mxu0 0.0
        %447 = vmatpush1.msra.mxu0 0.0
        %448 = vmatprep.subr.mxu0 0.0
        %449 = vmatpush1.msra.mxu0 0.0
        %450 = vmatprep.subr.mxu0 0.0
        %451 = vmatpush1.msra.mxu0 0.0
        %452 = vmatprep.subr.mxu0 0.0
        %453 = vmatpush1.msra.mxu0 0.0
        %454 = vmatprep.subr.mxu0 0.0
        %455 = vmatpush1.msra.mxu0 0.0
        %456 = vmatprep.subr.mxu0 0.0
        %457 = vmatpush1.msra.mxu0 0.0
        %458 = vmatprep.mubr.f32.mxu0 0.0
        %459 = vmatmul.mubr.f32.gmra.mrb[0].mxu0 %v392
        %v460 = vpop.f32.mrb[0].mxu0
        %v461 = vadd.f32 %v389, %v460
        %v462 = vpop.f32.mrb[0].mxu0
        %463 = vdwg.mxu0
        %vm464 = vcmask 64512
        %465 = vst.msk [vmem:[%s333] sm:$0xff] %vm464, %v461
        %467 = vrot.lane.b32.xlu0 %v461, 96
        %v468 = vpop.permute.xlu0 %467
        %470 = vst.msk [vmem:[%s340] sm:$0xff] %vm464, %v468
        %471 = vrot.lane.b32.xlu0 %v461, 64
        %v472 = vpop.permute.xlu0 %471
        %474 = vst.msk [vmem:[%s347] sm:$0xff] %vm464, %v472
        %475 = vrot.lane.b32.xlu0 %v461, 120
        %v476 = vpop.permute.xlu0 %475
        %s478 = scalar_lea.vmem %s333, 8 [#allocation7]
        %479 = vst.msk [vmem:[%s478] sm:$0xff] %vm464, %v476
        %480 = vrot.lane.b32.xlu0 %v461, 88
        %v481 = vpop.permute.xlu0 %480
        %s483 = scalar_lea.vmem %s340, 8 [#allocation8]
        %484 = vst.msk [vmem:[%s483] sm:$0xff] %vm464, %v481
        %485 = vrot.lane.b32.xlu0 %v461, 56
        %v486 = vpop.permute.xlu0 %485
        %s488 = scalar_lea.vmem %s347, 8 [#allocation10]
        %489 = vst.msk [vmem:[%s488] sm:$0xff] %vm464, %v486
        %490 = vrot.lane.b32.xlu0 %v461, 112
        %v491 = vpop.permute.xlu0 %490
        %s493 = scalar_lea.vmem %s333, 16 [#allocation7]
        %494 = vst.msk [vmem:[%s493] sm:$0xff] %vm464, %v491
        %495 = vrot.lane.b32.xlu0 %v461, 80
        %v496 = vpop.permute.xlu0 %495
        %s498 = scalar_lea.vmem %s340, 16 [#allocation8]
        %499 = vst.msk [vmem:[%s498] sm:$0xff] %vm464, %v496
        %500 = vrot.lane.b32.xlu0 %v461, 48
        %v501 = vpop.permute.xlu0 %500
        %s503 = scalar_lea.vmem %s347, 16 [#allocation10]
        %504 = vst.msk [vmem:[%s503] sm:$0xff] %vm464, %v501
        %505 = vrot.lane.b32.xlu0 %v461, 104
        %v506 = vpop.permute.xlu0 %505
        %s508 = scalar_lea.vmem %s333, 24 [#allocation7]
        %509 = vst.msk [vmem:[%s508] sm:$0xff] %vm464, %v506
        %510 = vrot.lane.b32.xlu0 %v461, 72
        %v511 = vpop.permute.xlu0 %510
        %s513 = scalar_lea.vmem %s340, 24 [#allocation8]
        %514 = vst.msk [vmem:[%s513] sm:$0xff] %vm464, %v511
        %515 = vrot.lane.b32.xlu0 %v461, 40
        %v516 = vpop.permute.xlu0 %515
        %s518 = scalar_lea.vmem %s347, 24 [#allocation10]
        %519 = vst.msk [vmem:[%s518] sm:$0xff] %vm464, %v516
        %s520 = sand.u32 %s163, 1
        %s521 = scalar_lea.sflag [#allocation4], %s520
        %s522 = sand.u32 %s163, 1
        %s523 = smul.addr %s522, 32
        %s524 = scalar_lea.vmem [#allocation7], %s523
        %s525 = sand.u32 %s29, 1
        %s526 = scalar_lea.sflag [#allocation9], %s525
        %s527 = sand.u32 %s191, 1
        %s528 = smul.addr %s527, 32
        %s529 = scalar_lea.vmem [#allocation8], %s528
        %s530 = sand.u32 %s29, 1
        %s531 = scalar_lea.sflag [#allocation9], %s530
        %s532 = sand.u32 %s219, 1
        %s533 = smul.addr %s532, 32
        %s534 = scalar_lea.vmem [#allocation10], %s533
        // Predicated region
        $region49: #{tpu_custom_call.1} parent=39 // pred_check
          %p535 = pneg %p173
        $region50: #{tpu_custom_call.1} parent=39 // pred_check_branch
          %537 = sbr.rel (%p535) target = $region52
        $region51: #{tpu_custom_call.1} parent=39 // pred_region
          %s539 = ssub.s32 512, 512
          %540 = vsyncadd %s521, %s539
          %s541 = smul.addr %s33, 4
          %s542 = sadd.s32 %s34, %s541
          %s543 = smul.addr %s542, 128
          %s544 = scalar_lea.hbm %s5, %s543
          %s545 = sshll.u32 %s524, 4
          %s546 = int_to_ptr.vmem [resolvable:$true] %s545
          %551 = dma.vmem_to_hbm [thread:$0]  %s546, 512, %s544, %s521, 128, 128, 8
        $region52: #{tpu_custom_call.1} parent=39 // pred_fallthru
          _
        // Predicated region
        $region53: #{tpu_custom_call.1} parent=39 // pred_check
          %p552 = pneg %p201
        $region54: #{tpu_custom_call.1} parent=39 // pred_check_branch
          %554 = sbr.rel (%p552) target = $region56
        $region55: #{tpu_custom_call.1} parent=39 // pred_region
          %s556 = ssub.s32 512, 512
          %557 = vsyncadd %s526, %s556
          %s558 = smul.addr %s33, 4
          %s559 = sadd.s32 %s34, %s558
          %s560 = smul.addr %s559, 128
          %s561 = scalar_lea.hbm %s6, %s560
          %s562 = sshll.u32 %s529, 4
          %s563 = int_to_ptr.vmem [resolvable:$true] %s562
          %568 = dma.vmem_to_hbm [thread:$0]  %s563, 512, %s561, %s526, 128, 128, 8
        $region56: #{tpu_custom_call.1} parent=39 // pred_fallthru
          _
        // Predicated region
        $region57: #{tpu_custom_call.1} parent=39 // pred_check
          %p569 = pneg %p229
        $region58: #{tpu_custom_call.1} parent=39 // pred_check_branch
          %571 = sbr.rel (%p569) target = $region60
        $region59: #{tpu_custom_call.1} parent=39 // pred_region
          %s573 = ssub.s32 512, 512
          %574 = vsyncadd %s531, %s573
          %s575 = smul.addr %s33, 4
          %s576 = sadd.s32 %s34, %s575
          %s577 = smul.addr %s576, 128
          %s578 = scalar_lea.hbm %s7, %s577
          %s579 = sshll.u32 %s534, 4
          %s580 = int_to_ptr.vmem [resolvable:$true] %s579
          %585 = dma.vmem_to_hbm [thread:$0]  %s580, 512, %s578, %s531, 128, 128, 8
        $region60: #{tpu_custom_call.1} parent=39 // pred_fallthru
          _
      $region40: #{tpu_custom_call.1} parent=5 // pred_fallthru
        _
      %p586 = scmp.le.s32.totalorder 2, %s24
      // Predicated region
      $region61: #{tpu_custom_call.1} parent=5 // pred_check
        %p587 = pneg %p586
      $region62: #{tpu_custom_call.1} parent=5 // pred_check_branch
        %589 = sbr.rel (%p587) target = $region64
      $region63: #{tpu_custom_call.1} parent=5 // pred_region
        %s590 = ssub.s32 %s24, 2
        // Predicated region
        $region65: #{tpu_custom_call.1} parent=63 // pred_check
          %p591 = pneg %p179
        $region66: #{tpu_custom_call.1} parent=63 // pred_check_branch
          %593 = sbr.rel (%p591) target = $region68
        $region67: #{tpu_custom_call.1} parent=63 // pred_region
          %s594 = sand.u32 %s164, 1
          %s595 = scalar_lea.sflag [#allocation4], %s594
          %s596 = sand.u32 %s164, 1
          %s597 = smul.addr %s596, 32
          %s598 = scalar_lea.vmem [#allocation7], %s597
          %599 = dma.done %s595, 512
        $region68: #{tpu_custom_call.1} parent=63 // pred_fallthru
          _
        // Predicated region
        $region69: #{tpu_custom_call.1} parent=63 // pred_check
          %p600 = pneg %p207
        $region70: #{tpu_custom_call.1} parent=63 // pred_check_branch
          %602 = sbr.rel (%p600) target = $region72
        $region71: #{tpu_custom_call.1} parent=63 // pred_region
          %s603 = sand.u32 %s30, 1
          %s604 = scalar_lea.sflag [#allocation9], %s603
          %s605 = sand.u32 %s192, 1
          %s606 = smul.addr %s605, 32
          %s607 = scalar_lea.vmem [#allocation8], %s606
          %608 = dma.done %s604, 512
        $region72: #{tpu_custom_call.1} parent=63 // pred_fallthru
          _
        // Predicated region
        $region73: #{tpu_custom_call.1} parent=63 // pred_check
          %p609 = pneg %p235
        $region74: #{tpu_custom_call.1} parent=63 // pred_check_branch
          %611 = sbr.rel (%p609) target = $region76
        $region75: #{tpu_custom_call.1} parent=63 // pred_region
          %s612 = sand.u32 %s30, 1
          %s613 = scalar_lea.sflag [#allocation9], %s612
          %s614 = sand.u32 %s220, 1
          %s615 = smul.addr %s614, 32
          %s616 = scalar_lea.vmem [#allocation10], %s615
          %617 = dma.done %s613, 512
        $region76: #{tpu_custom_call.1} parent=63 // pred_fallthru
          _
      $region64: #{tpu_custom_call.1} parent=5 // pred_fallthru
        _
    $region6: #{tpu_custom_call.1} parent=1 // loop_footer
      %s28 = sadd.s32 1, %s24
    $region7: #{tpu_custom_call.1} parent=1 // loop_footer_branch
      %23 = sbr.rel target = $region3
    $region8: #{tpu_custom_call.1} parent=1 // loop_exit
      _
    %618 = vsyncpa [#allocation3], 1
    %s619 = scalar_lea.sflag [#allocation3], 1
    %620 = vsyncpa %s619, 1
    %621 = vsyncpa [#allocation6], 1
    %622 = vsyncpa [#allocation4], 1
    %s623 = scalar_lea.sflag [#allocation4], 1
    %624 = vsyncpa %s623, 1
    %625 = vsyncpa [#allocation9], 1
    %s626 = scalar_lea.sflag [#allocation9], 1
    %627 = vsyncpa %s626, 1

// kernel: tpu_custom_call.1
$region0: #{tpu_custom_call.1}
  #allocation0 [shape = 'u32[]', space=smem, size = 0x4, offset = 0x4, fixed_abs, tag = 'smem constant byte address 0x4 - core index']
  #allocation1 [shape = 'u32[144,128]{1,0:T(1,128)}', space=vmem, size = 0x12000, scoped, tag = 'internal scratch']
  %s0 = inlined_call_operand.hbm [shape: f32[2,8,32], index: 0, kind: input, shape index: {}]
  %s1 = inlined_call_operand.vmem [shape: f32[1,32], index: 1, kind: input, shape index: {}]
  %s2 = inlined_call_operand.vmem [shape: f32[1,32], index: 2, kind: input, shape index: {}]
  %s3 = inlined_call_operand.hbm [shape: f32[32,96], index: 3, kind: input, shape index: {}]
  %s4 = inlined_call_operand.vmem [shape: f32[1,96], index: 4, kind: input, shape index: {}]
  %s5 = inlined_call_operand.hbm [shape: f32[2,4,8,8], index: 5, kind: output, shape index: {0}]
  %s6 = inlined_call_operand.hbm [shape: f32[2,4,8,8], index: 6, kind: output, shape index: {1}]
  %s7 = inlined_call_operand.hbm [shape: f32[2,4,8,8], index: 7, kind: output, shape index: {2}]
  %8 = xla_tuple %s5, %s6, %s7
  %s9 = sld [smem:[#allocation0]]
  $region77: #{tpu_custom_call.1} parent=0
    _
  %s11 = ssub.s32 1, %s9
  %s12 = scalar_select 0, %s11, %s9
  $region1: #{tpu_custom_call.1} parent=0
    #allocation2 [shape = 'u8[8192]{0}', space=vmem, size = 0x2000, scoped, tag = 'input window, operand 0']
    #allocation3 [shape = 's32[2]{0}', space=sflag, size = 0x8, scoped, tag = 'scoped memory for tpu_custom_call.1']
    #allocation4 [shape = 's32[2]{0}', space=sflag, size = 0x8, scoped, tag = 'scoped memory for tpu_custom_call.1']
    #allocation5 [shape = 'u8[16384]{0}', space=vmem, size = 0x4000, scoped, tag = 'input window, operand 3, single buffered']
    #allocation6 [shape = 's32[1]{0}', space=sflag, size = 0x4, scoped, tag = 'scoped memory for tpu_custom_call.1']
    #allocation7 [shape = 'u8[32768]{0}', space=vmem, size = 0x8000, scoped, tag = 'output window, operand 0']
    #allocation8 [shape = 'u8[32768]{0}', space=vmem, size = 0x8000, scoped, tag = 'output window, operand 1']
    #allocation9 [shape = 's32[2]{0}', space=sflag, size = 0x8, scoped, tag = 'scoped memory for tpu_custom_call.1']
    #allocation10 [shape = 'u8[32768]{0}', space=vmem, size = 0x8000, scoped, tag = 'output window, operand 2']
    %13 = vsyncpa [#allocation3], 0
    %s14 = scalar_lea.sflag [#allocation3], 1
    %15 = vsyncpa %s14, 0
    %16 = vsyncpa [#allocation6], 0
    %17 = vsyncpa [#allocation4], 0
    %s18 = scalar_lea.sflag [#allocation4], 1
    %19 = vsyncpa %s18, 0
    %20 = vsyncpa [#allocation9], 0
    %s21 = scalar_lea.sflag [#allocation9], 1
    %22 = vsyncpa %s21, 0
    loop: start=0, step=1, limit=4
    $region2: #{tpu_custom_call.1} parent=1 // loop_pre_header
      _
    $region3: #{tpu_custom_call.1} parent=1 // loop_header
      %s24 = sphi 0, %s28
      %p25 = scmp.ge.s32.totalorder %s24, 4
      %s31 = sphi 0, %s43
      %s32 = sphi 0, %s39
      %s33 = sphi 0, %s31
      %s34 = sphi 0, %s32
      %s35 = sphi 0, %s33
      %s36 = sphi 0, %s34
      %s48 = sphi 0, %s50
      %s51 = sphi 0, %s48
      %s52 = sphi 0, %s51
      %s68 = sphi 0, %s52
      %s72 = sphi 0, %s72
      %s74 = sphi 0, %s72
      %s75 = sphi 0, %s74
      %s89 = sphi 0, %s75
      %s93 = sphi 0, %s93
      %s95 = sphi 0, %s93
      %s96 = sphi 0, %s95
      %s110 = sphi 0, %s96
      %s114 = sphi 0, %s114
      %s116 = sphi 0, %s114
      %s117 = sphi 0, %s116
      %s131 = sphi 0, %s117
      %s135 = sphi 0, %s135
      %s137 = sphi 0, %s135
      %s138 = sphi 0, %s137
      %s152 = sphi 0, %s138
      %s160 = sphi 0, %s162
      %s163 = sphi 0, %s160
      %s164 = sphi 0, %s163
      %s180 = sphi 0, %s164
      %s188 = sphi 0, %s190
      %s191 = sphi 0, %s188
      %s192 = sphi 0, %s191
      %s208 = sphi 0, %s192
      %s216 = sphi 0, %s218
      %s219 = sphi 0, %s216
      %s220 = sphi 0, %s219
      %s236 = sphi 0, %s220
    $region4: #{tpu_custom_call.1} parent=1 // loop_header_branch
      %27 = sbr.rel (%p25) target = $region8
    $region5: #{tpu_custom_call.1} parent=1 // loop_body
      %s29 = ssub.s32 %s24, 1
      %s30 = ssub.s32 %s24, 2
      %s37 = sadd.s32 1, %s32
      %p38 = scmp.ge.s32.totalorder %s37, 1
      %s39 = scalar_select %p38, 0, %s37
      %s40 = sadd.s32 1, %s31
      %s41 = scalar_select %p38, %s40, %s31
      %p42 = scmp.ge.s32.totalorder %s41, 2
      %s43 = scalar_select %p42, 0, %s41
      %s44 = ssub.s32 %s31, %s43
      %s45 = ssub.s32 %s32, %s39
      %s46 = sor.u32 %s44, %s45
      %p47 = scmp.eq.s32.totalorder %s46, 0
      %s49 = sadd.s32 %s48, 1
      %s50 = scalar_select %p47, %s48, %s49
      %p53 = pneg %p47
      %p54 = scmp.eq.s32.totalorder %s24, 1
      %p55 = por %p53, %p54
      %p56 = scmp.ne.s32.totalorder %s48, %s51
      %p57 = scmp.eq.s32.totalorder %s24, 0
      %p58 = por %p56, %p57
      %p59 = scmp.ne.s32.totalorder %s48, %s51
      %p60 = scmp.eq.s32.totalorder %s29, 1
      %p61 = por %p59, %p60
      %p62 = scmp.ne.s32.totalorder %s51, %s52
      %p63 = scmp.eq.s32.totalorder %s29, 0
      %p64 = por %p62, %p63
      %p65 = scmp.ne.s32.totalorder %s51, %s52
      %p66 = scmp.eq.s32.totalorder %s30, 1
      %p67 = por %p65, %p66
      %p69 = scmp.ne.s32.totalorder %s52, %s68
      %p70 = scmp.eq.s32.totalorder %s30, 0
      %p71 = por %p69, %p70
      %s73 = sadd.s32 %s72, 1
      %p76 = scmp.eq.s32.totalorder %s24, 1
      %p77 = scmp.ne.s32.totalorder %s72, %s74
      %p78 = scmp.eq.s32.totalorder %s24, 0
      %p79 = por %p77, %p78
      %p80 = scmp.ne.s32.totalorder %s72, %s74
      %p81 = scmp.eq.s32.totalorder %s29, 1
      %p82 = por %p80, %p81
      %p83 = scmp.ne.s32.totalorder %s74, %s75
      %p84 = scmp.eq.s32.totalorder %s29, 0
      %p85 = por %p83, %p84
      %p86 = scmp.ne.s32.totalorder %s74, %s75
      %p87 = scmp.eq.s32.totalorder %s30, 1
      %p88 = por %p86, %p87
      %p90 = scmp.ne.s32.totalorder %s75, %s89
      %p91 = scmp.eq.s32.totalorder %s30, 0
      %p92 = por %p90, %p91
      %s94 = sadd.s32 %s93, 1
      %p97 = scmp.eq.s32.totalorder %s24, 1
      %p98 = scmp.ne.s32.totalorder %s93, %s95
      %p99 = scmp.eq.s32.totalorder %s24, 0
      %p100 = por %p98, %p99
      %p101 = scmp.ne.s32.totalorder %s93, %s95
      %p102 = scmp.eq.s32.totalorder %s29, 1
      %p103 = por %p101, %p102
      %p104 = scmp.ne.s32.totalorder %s95, %s96
      %p105 = scmp.eq.s32.totalorder %s29, 0
      %p106 = por %p104, %p105
      %p107 = scmp.ne.s32.totalorder %s95, %s96
      %p108 = scmp.eq.s32.totalorder %s30, 1
      %p109 = por %p107, %p108
      %p111 = scmp.ne.s32.totalorder %s96, %s110
      %p112 = scmp.eq.s32.totalorder %s30, 0
      %p113 = por %p111, %p112
      %s115 = sadd.s32 %s114, 1
      %p118 = scmp.eq.s32.totalorder %s24, 1
      %p119 = scmp.ne.s32.totalorder %s114, %s116
      %p120 = scmp.eq.s32.totalorder %s24, 0
      %p121 = por %p119, %p120
      %p122 = scmp.ne.s32.totalorder %s114, %s116
      %p123 = scmp.eq.s32.totalorder %s29, 1
      %p124 = por %p122, %p123
      %p125 = scmp.ne.s32.totalorder %s116, %s117
      %p126 = scmp.eq.s32.totalorder %s29, 0
      %p127 = por %p125, %p126
      %p128 = scmp.ne.s32.totalorder %s116, %s117
      %p129 = scmp.eq.s32.totalorder %s30, 1
      %p130 = por %p128, %p129
      %p132 = scmp.ne.s32.totalorder %s117, %s131
      %p133 = scmp.eq.s32.totalorder %s30, 0
      %p134 = por %p132, %p133
      %s136 = sadd.s32 %s135, 1
      %p139 = scmp.eq.s32.totalorder %s24, 1
      %p140 = scmp.ne.s32.totalorder %s135, %s137
      %p141 = scmp.eq.s32.totalorder %s24, 0
      %p142 = por %p140, %p141
      %p143 = scmp.ne.s32.totalorder %s135, %s137
      %p144 = scmp.eq.s32.totalorder %s29, 1
      %p145 = por %p143, %p144
      %p146 = scmp.ne.s32.totalorder %s137, %s138
      %p147 = scmp.eq.s32.totalorder %s29, 0
      %p148 = por %p146, %p147
      %p149 = scmp.ne.s32.totalorder %s137, %s138
      %p150 = scmp.eq.s32.totalorder %s30, 1
      %p151 = por %p149, %p150
      %p153 = scmp.ne.s32.totalorder %s138, %s152
      %p154 = scmp.eq.s32.totalorder %s30, 0
      %p155 = por %p153, %p154
      %s156 = ssub.s32 %s31, %s43
      %s157 = ssub.s32 %s32, %s39
      %s158 = sor.u32 %s156, %s157
      %p159 = scmp.eq.s32.totalorder %s158, 0
      %s161 = sadd.s32 %s160, 1
      %s162 = scalar_select %p159, %s160, %s161
      %p165 = pneg %p159
      %p166 = scmp.eq.s32.totalorder %s24, 1
      %p167 = por %p165, %p166
      %p168 = scmp.ne.s32.totalorder %s160, %s163
      %p169 = scmp.eq.s32.totalorder %s24, 0
      %p170 = por %p168, %p169
      %p171 = scmp.ne.s32.totalorder %s160, %s163
      %p172 = scmp.eq.s32.totalorder %s29, 1
      %p173 = por %p171, %p172
      %p174 = scmp.ne.s32.totalorder %s163, %s164
      %p175 = scmp.eq.s32.totalorder %s29, 0
      %p176 = por %p174, %p175
      %p177 = scmp.ne.s32.totalorder %s163, %s164
      %p178 = scmp.eq.s32.totalorder %s30, 1
      %p179 = por %p177, %p178
      %p181 = scmp.ne.s32.totalorder %s164, %s180
      %p182 = scmp.eq.s32.totalorder %s30, 0
      %p183 = por %p181, %p182
      %s184 = ssub.s32 %s31, %s43
      %s185 = ssub.s32 %s32, %s39
      %s186 = sor.u32 %s184, %s185
      %p187 = scmp.eq.s32.totalorder %s186, 0
      %s189 = sadd.s32 %s188, 1
      %s190 = scalar_select %p187, %s188, %s189
      %p193 = pneg %p187
      %p194 = scmp.eq.s32.totalorder %s24, 1
      %p195 = por %p193, %p194
      %p196 = scmp.ne.s32.totalorder %s188, %s191
      %p197 = scmp.eq.s32.totalorder %s24, 0
      %p198 = por %p196, %p197
      %p199 = scmp.ne.s32.totalorder %s188, %s191
      %p200 = scmp.eq.s32.totalorder %s29, 1
      %p201 = por %p199, %p200
      %p202 = scmp.ne.s32.totalorder %s191, %s192
      %p203 = scmp.eq.s32.totalorder %s29, 0
      %p204 = por %p202, %p203
      %p205 = scmp.ne.s32.totalorder %s191, %s192
      %p206 = scmp.eq.s32.totalorder %s30, 1
      %p207 = por %p205, %p206
      %p209 = scmp.ne.s32.totalorder %s192, %s208
      %p210 = scmp.eq.s32.totalorder %s30, 0
      %p211 = por %p209, %p210
      %s212 = ssub.s32 %s31, %s43
      %s213 = ssub.s32 %s32, %s39
      %s214 = sor.u32 %s212, %s213
      %p215 = scmp.eq.s32.totalorder %s214, 0
      %s217 = sadd.s32 %s216, 1
      %s218 = scalar_select %p215, %s216, %s217
      %p221 = pneg %p215
      %p222 = scmp.eq.s32.totalorder %s24, 1
      %p223 = por %p221, %p222
      %p224 = scmp.ne.s32.totalorder %s216, %s219
      %p225 = scmp.eq.s32.totalorder %s24, 0
      %p226 = por %p224, %p225
      %p227 = scmp.ne.s32.totalorder %s216, %s219
      %p228 = scmp.eq.s32.totalorder %s29, 1
      %p229 = por %p227, %p228
      %p230 = scmp.ne.s32.totalorder %s219, %s220
      %p231 = scmp.eq.s32.totalorder %s29, 0
      %p232 = por %p230, %p231
      %p233 = scmp.ne.s32.totalorder %s219, %s220
      %p234 = scmp.eq.s32.totalorder %s30, 1
      %p235 = por %p233, %p234
      %p237 = scmp.ne.s32.totalorder %s220, %s236
      %p238 = scmp.eq.s32.totalorder %s30, 0
      %p239 = por %p237, %p238
      %p240 = scmp.le.s32.totalorder 1, %s24
      %p241 = scmp.lt.s32.totalorder %s24, 3
      %p242 = pnand %p240, %p241
      %p243 = pneg %p242
      // Predicated region
      $region9: #{tpu_custom_call.1} parent=5 // pred_check
        _
      $region10: #{tpu_custom_call.1} parent=5 // pred_check_branch
        %245 = sbr.rel (%p242) target = $region12
      $region11: #{tpu_custom_call.1} parent=5 // pred_region
        %s246 = ssub.s32 %s24, 1
        // Predicated region
        $region13: #{tpu_custom_call.1} parent=11 // pred_check
          %p247 = pneg %p85
        $region14: #{tpu_custom_call.1} parent=11 // pred_check_branch
          %249 = sbr.rel (%p247) target = $region16
        $region15: #{tpu_custom_call.1} parent=11 // pred_region
          _
        $region16: #{tpu_custom_call.1} parent=11 // pred_fallthru
          _
        // Predicated region
        $region17: #{tpu_custom_call.1} parent=11 // pred_check
          %p250 = pneg %p106
        $region18: #{tpu_custom_call.1} parent=11 // pred_check_branch
          %252 = sbr.rel (%p250) target = $region20
        $region19: #{tpu_custom_call.1} parent=11 // pred_region
          _
        $region20: #{tpu_custom_call.1} parent=11 // pred_fallthru
          _
        // Predicated region
        $region21: #{tpu_custom_call.1} parent=11 // pred_check
          %p253 = pneg %p127
        $region22: #{tpu_custom_call.1} parent=11 // pred_check_branch
          %255 = sbr.rel (%p253) target = $region24
        $region23: #{tpu_custom_call.1} parent=11 // pred_region
          %s257 = ssub.s32 512, 512
          %258 = vsyncadd [#allocation6], %s257
          %s259 = sshll.u32 [#allocation5], 4
          %s260 = int_to_ptr.vmem [resolvable:$true] %s259
          %265 = dma.hbm_to_vmem [thread:$0]  %s3, 512, %s260, [#allocation6], 128, 128, 8
        $region24: #{tpu_custom_call.1} parent=11 // pred_fallthru
          _
        // Predicated region
        $region25: #{tpu_custom_call.1} parent=11 // pred_check
          %p266 = pneg %p148
        $region26: #{tpu_custom_call.1} parent=11 // pred_check_branch
          %268 = sbr.rel (%p266) target = $region28
        $region27: #{tpu_custom_call.1} parent=11 // pred_region
          _
        $region28: #{tpu_custom_call.1} parent=11 // pred_fallthru
          _
      $region12: #{tpu_custom_call.1} parent=5 // pred_fallthru
        _
      %p269 = scmp.lt.s32.totalorder %s24, 2
      // Predicated region
      $region29: #{tpu_custom_call.1} parent=5 // pred_check
        %p270 = pneg %p269
      $region30: #{tpu_custom_call.1} parent=5 // pred_check_branch
        %272 = sbr.rel (%p270) target = $region32
      $region31: #{tpu_custom_call.1} parent=5 // pred_region
        // Predicated region
        $region33: #{tpu_custom_call.1} parent=31 // pred_check
          %p273 = pneg %p58
        $region34: #{tpu_custom_call.1} parent=31 // pred_check_branch
          %275 = sbr.rel (%p273) target = $region36
        $region35: #{tpu_custom_call.1} parent=31 // pred_region
          %s276 = sand.u32 %s48, 1
          %s277 = scalar_lea.sflag [#allocation3], %s276
          %s278 = sand.u32 %s48, 1
          %s279 = smul.addr %s278, 8
          %s280 = scalar_lea.vmem [#allocation2], %s279
          %s282 = ssub.s32 128, 128
          %283 = vsyncadd %s277, %s282
          %s284 = sadd.s32 %s32, %s31
          %s285 = smul.addr %s284, 128
          %s286 = scalar_lea.hbm %s0, %s285
          %s288 = sshll.u32 %s280, 4
          %s289 = int_to_ptr.vmem [resolvable:$true] %s288
          %291 = dma.hbm_to_vmem [thread:$0]  %s286, 128, %s289, %s277
        $region36: #{tpu_custom_call.1} parent=31 // pred_fallthru
          _
      $region32: #{tpu_custom_call.1} parent=5 // pred_fallthru
        _
      %p292 = scmp.le.s32.totalorder 1, %s24
      %p293 = scmp.lt.s32.totalorder %s24, 3
      %p294 = pnand %p292, %p293
      %p295 = pneg %p294
      // Predicated region
      $region37: #{tpu_custom_call.1} parent=5 // pred_check
        _
      $region38: #{tpu_custom_call.1} parent=5 // pred_check_branch
        %297 = sbr.rel (%p294) target = $region40
      $region39: #{tpu_custom_call.1} parent=5 // pred_region
        %s298 = ssub.s32 %s24, 1
        %s299 = sand.u32 %s51, 1
        %s300 = scalar_lea.sflag [#allocation3], %s299
        %s301 = sand.u32 %s51, 1
        %s302 = smul.addr %s301, 8
        %s303 = scalar_lea.vmem [#allocation2], %s302
        // Predicated region
        $region41: #{tpu_custom_call.1} parent=39 // pred_check
          %p304 = pneg %p64
        $region42: #{tpu_custom_call.1} parent=39 // pred_check_branch
          %306 = sbr.rel (%p304) target = $region44
        $region43: #{tpu_custom_call.1} parent=39 // pred_region
          %307 = dma.done %s300, 128
        $region44: #{tpu_custom_call.1} parent=39 // pred_fallthru
          _
        // Predicated region
        $region45: #{tpu_custom_call.1} parent=39 // pred_check
          %p308 = pneg %p127
        $region46: #{tpu_custom_call.1} parent=39 // pred_check_branch
          %310 = sbr.rel (%p308) target = $region48
        $region47: #{tpu_custom_call.1} parent=39 // pred_region
          %311 = dma.done [#allocation6], 512
        $region48: #{tpu_custom_call.1} parent=39 // pred_fallthru
          _
        %s312 = sand.u32 %s51, 1
        %s313 = scalar_lea.sflag [#allocation3], %s312
        %s314 = sand.u32 %s51, 1
        %s315 = smul.addr %s314, 8
        %s316 = scalar_lea.vmem [#allocation2], %s315
        %p317 = pneg %p64
        %p318 = pneg %p61
        %p319 = pneg %p85
        %p320 = pneg %p82
        %p321 = pneg %p106
        %p322 = pneg %p103
        %p323 = pneg %p127
        %p324 = pneg %p124
        %p325 = pneg %p148
        %p326 = pneg %p145
        %p327 = pneg %p176
        %p328 = pneg %p173
        %s329 = sand.u32 %s163, 1
        %s330 = scalar_lea.sflag [#allocation4], %s329
        %s331 = sand.u32 %s163, 1
        %s332 = smul.addr %s331, 32
        %s333 = scalar_lea.vmem [#allocation7], %s332
        %p334 = pneg %p204
        %p335 = pneg %p201
        %s336 = sand.u32 %s29, 1
        %s337 = scalar_lea.sflag [#allocation9], %s336
        %s338 = sand.u32 %s191, 1
        %s339 = smul.addr %s338, 32
        %s340 = scalar_lea.vmem [#allocation8], %s339
        %p341 = pneg %p232
        %p342 = pneg %p229
        %s343 = sand.u32 %s29, 1
        %s344 = scalar_lea.sflag [#allocation9], %s343
        %s345 = sand.u32 %s219, 1
        %s346 = smul.addr %s345, 32
        %s347 = scalar_lea.vmem [#allocation10], %s346
        %v348 = vld [vmem:[%s303] sm:$0xff]
        %v349 = vld [vmem:[%s1] sm:$0x1]
        %v350 = vld [vmem:[%s2] sm:$0x1]
        %vm351 = vcmask 261120
        %v352 = vsel %vm351, %v348, 0.0
        %353 = vadd.xlane.f32.xlu0 %v352
        %v354 = vpop.xlane.xlu0 %353
        %v355 = vrcp.pop 32.0
        %v356 = vmul.f32 %v354, %v355
        %v357 = vsub.f32 %v348, %v356
        %v358 = vmul.f32 %v357, %v357
        %v359 = vsel %vm351, %v358, 0.0
        %360 = vadd.xlane.f32.xlu0 %v359
        %v361 = vpop.xlane.xlu0 %360
        %v362 = vmul.f32 %v361, %v355
        %v363 = vadd.f32 %v362, 1e-05
        %v364 = vrsqrt.pop %v363
        %v365 = vmul.f32 %v357, %v364
        %v367 = vlaneseq
        %v368 = vshrl.u32 %v367, 7
        %v369 = vsub.s32 0, %v368
        %v370 = vrot.slane %v349, %v369
        %v372 = vmul.f32 %v365, %v370
        %v374 = vlaneseq
        %v375 = vshrl.u32 %v374, 7
        %v376 = vsub.s32 0, %v375
        %v377 = vrot.slane %v350, %v376
        %v379 = vadd.f32 %v372, %v377
        %v380 = vld [vmem:[#allocation5] sm:$0xff]
        %v381 = vld [vmem:[#allocation5 + $0x8] sm:$0xff]
        %v382 = vld [vmem:[#allocation5 + $0x10] sm:$0xff]
        %v383 = vld [vmem:[#allocation5 + $0x18] sm:$0xff]
        %v384 = vld [vmem:[%s4] sm:$0x1]
        %v386 = vlaneseq
        %v387 = vshrl.u32 %v386, 7
        %v388 = vsub.s32 0, %v387
        %v389 = vrot.slane %v384, %v388
        %v392 = vsel %vm351, %v379, 0
        %394 = vmatprep.subr.mxu0 0.0
        %395 = vmatpush1.msra.mxu0 %v380
        %396 = vmatprep.subr.mxu0 0.0
        %397 = vmatpush1.msra.mxu0 %v381
        %398 = vmatprep.subr.mxu0 0.0
        %399 = vmatpush1.msra.mxu0 %v382
        %400 = vmatprep.subr.mxu0 0.0
        %401 = vmatpush1.msra.mxu0 %v383
        %402 = vmatprep.subr.mxu0 0.0
        %403 = vmatpush1.msra.mxu0 0.0
        %404 = vmatprep.subr.mxu0 0.0
        %405 = vmatpush1.msra.mxu0 0.0
        %406 = vmatprep.subr.mxu0 0.0
        %407 = vmatpush1.msra.mxu0 0.0
        %408 = vmatprep.subr.mxu0 0.0
        %409 = vmatpush1.msra.mxu0 0.0
        %410 = vmatprep.subr.mxu0 0.0
        %411 = vmatpush1.msra.mxu0 0.0
        %412 = vmatprep.subr.mxu0 0.0
        %413 = vmatpush1.msra.mxu0 0.0
        %414 = vmatprep.subr.mxu0 0.0
        %415 = vmatpush1.msra.mxu0 0.0
        %416 = vmatprep.subr.mxu0 0.0
        %417 = vmatpush1.msra.mxu0 0.0
        %418 = vmatprep.subr.mxu0 0.0
        %419 = vmatpush1.msra.mxu0 0.0
        %420 = vmatprep.subr.mxu0 0.0
        %421 = vmatpush1.msra.mxu0 0.0
        %422 = vmatprep.subr.mxu0 0.0
        %423 = vmatpush1.msra.mxu0 0.0
        %424 = vmatprep.subr.mxu0 0.0
        %425 = vmatpush1.msra.mxu0 0.0
        %426 = vmatprep.subr.mxu0 0.0
        %427 = vmatpush1.msra.mxu0 0.0
        %428 = vmatprep.subr.mxu0 0.0
        %429 = vmatpush1.msra.mxu0 0.0
        %430 = vmatprep.subr.mxu0 0.0
        %431 = vmatpush1.msra.mxu0 0.0
        %432 = vmatprep.subr.mxu0 0.0
        %433 = vmatpush1.msra.mxu0 0.0
        %434 = vmatprep.subr.mxu0 0.0
        %435 = vmatpush1.msra.mxu0 0.0
        %436 = vmatprep.subr.mxu0 0.0
        %437 = vmatpush1.msra.mxu0 0.0
        %438 = vmatprep.subr.mxu0 0.0
        %439 = vmatpush1.msra.mxu0 0.0
        %440 = vmatprep.subr.mxu0 0.0
        %441 = vmatpush1.msra.mxu0 0.0
        %442 = vmatprep.subr.mxu0 0.0
        %443 = vmatpush1.msra.mxu0 0.0
        %444 = vmatprep.subr.mxu0 0.0
        %445 = vmatpush1.msra.mxu0 0.0
        %446 = vmatprep.subr.mxu0 0.0
        %447 = vmatpush1.msra.mxu0 0.0
        %448 = vmatprep.subr.mxu0 0.0
        %449 = vmatpush1.msra.mxu0 0.0
        %450 = vmatprep.subr.mxu0 0.0
        %451 = vmatpush1.msra.mxu0 0.0
        %452 = vmatprep.subr.mxu0 0.0
        %453 = vmatpush1.msra.mxu0 0.0
        %454 = vmatprep.subr.mxu0 0.0
        %455 = vmatpush1.msra.mxu0 0.0
        %456 = vmatprep.subr.mxu0 0.0
        %457 = vmatpush1.msra.mxu0 0.0
        %458 = vmatprep.mubr.f32.mxu0 0.0
        %459 = vmatmul.mubr.f32.gmra.mrb[0].mxu0 %v392
        %v460 = vpop.f32.mrb[0].mxu0
        %v461 = vadd.f32 %v389, %v460
        %v462 = vpop.f32.mrb[0].mxu0
        %463 = vdwg.mxu0
        %vm464 = vcmask 64512
        %465 = vst.msk [vmem:[%s333] sm:$0xff] %vm464, %v461
        %467 = vrot.lane.b32.xlu0 %v461, 96
        %v468 = vpop.permute.xlu0 %467
        %470 = vst.msk [vmem:[%s340] sm:$0xff] %vm464, %v468
        %471 = vrot.lane.b32.xlu0 %v461, 64
        %v472 = vpop.permute.xlu0 %471
        %474 = vst.msk [vmem:[%s347] sm:$0xff] %vm464, %v472
        %475 = vrot.lane.b32.xlu0 %v461, 120
        %v476 = vpop.permute.xlu0 %475
        %s478 = scalar_lea.vmem %s333, 8 [#allocation7]
        %479 = vst.msk [vmem:[%s478] sm:$0xff] %vm464, %v476
        %480 = vrot.lane.b32.xlu0 %v461, 88
        %v481 = vpop.permute.xlu0 %480
        %s483 = scalar_lea.vmem %s340, 8 [#allocation8]
        %484 = vst.msk [vmem:[%s483] sm:$0xff] %vm464, %v481
        %485 = vrot.lane.b32.xlu0 %v461, 56
        %v486 = vpop.permute.xlu0 %485
        %s488 = scalar_lea.vmem %s347, 8 [#allocation10]
        %489 = vst.msk [vmem:[%s488] sm:$0xff] %vm464, %v486
        %490 = vrot.lane.b32.xlu0 %v461, 112
        %v491 = vpop.permute.xlu0 %490
        %s493 = scalar_lea.vmem %s333, 16 [#allocation7]
        %494 = vst.msk [vmem:[%s493] sm:$0xff] %vm464, %v491
        %495 = vrot.lane.b32.xlu0 %v461, 80
        %v496 = vpop.permute.xlu0 %495
        %s498 = scalar_lea.vmem %s340, 16 [#allocation8]
        %499 = vst.msk [vmem:[%s498] sm:$0xff] %vm464, %v496
        %500 = vrot.lane.b32.xlu0 %v461, 48
        %v501 = vpop.permute.xlu0 %500
        %s503 = scalar_lea.vmem %s347, 16 [#allocation10]
        %504 = vst.msk [vmem:[%s503] sm:$0xff] %vm464, %v501
        %505 = vrot.lane.b32.xlu0 %v461, 104
        %v506 = vpop.permute.xlu0 %505
        %s508 = scalar_lea.vmem %s333, 24 [#allocation7]
        %509 = vst.msk [vmem:[%s508] sm:$0xff] %vm464, %v506
        %510 = vrot.lane.b32.xlu0 %v461, 72
        %v511 = vpop.permute.xlu0 %510
        %s513 = scalar_lea.vmem %s340, 24 [#allocation8]
        %514 = vst.msk [vmem:[%s513] sm:$0xff] %vm464, %v511
        %515 = vrot.lane.b32.xlu0 %v461, 40
        %v516 = vpop.permute.xlu0 %515
        %s518 = scalar_lea.vmem %s347, 24 [#allocation10]
        %519 = vst.msk [vmem:[%s518] sm:$0xff] %vm464, %v516
        %s520 = sand.u32 %s163, 1
        %s521 = scalar_lea.sflag [#allocation4], %s520
        %s522 = sand.u32 %s163, 1
        %s523 = smul.addr %s522, 32
        %s524 = scalar_lea.vmem [#allocation7], %s523
        %s525 = sand.u32 %s29, 1
        %s526 = scalar_lea.sflag [#allocation9], %s525
        %s527 = sand.u32 %s191, 1
        %s528 = smul.addr %s527, 32
        %s529 = scalar_lea.vmem [#allocation8], %s528
        %s530 = sand.u32 %s29, 1
        %s531 = scalar_lea.sflag [#allocation9], %s530
        %s532 = sand.u32 %s219, 1
        %s533 = smul.addr %s532, 32
        %s534 = scalar_lea.vmem [#allocation10], %s533
        // Predicated region
        $region49: #{tpu_custom_call.1} parent=39 // pred_check
          %p535 = pneg %p173
        $region50: #{tpu_custom_call.1} parent=39 // pred_check_branch
          %537 = sbr.rel (%p535) target = $region52
        $region51: #{tpu_custom_call.1} parent=39 // pred_region
          %s539 = ssub.s32 512, 512
          %540 = vsyncadd %s521, %s539
          %s541 = smul.addr %s33, 4
          %s542 = sadd.s32 %s34, %s541
          %s543 = smul.addr %s542, 128
          %s544 = scalar_lea.hbm %s5, %s543
          %s545 = sshll.u32 %s524, 4
          %s546 = int_to_ptr.vmem [resolvable:$true] %s545
          %551 = dma.vmem_to_hbm [thread:$0]  %s546, 512, %s544, %s521, 128, 128, 8
        $region52: #{tpu_custom_call.1} parent=39 // pred_fallthru
          _
        // Predicated region
        $region53: #{tpu_custom_call.1} parent=39 // pred_check
          %p552 = pneg %p201
        $region54: #{tpu_custom_call.1} parent=39 // pred_check_branch
          %554 = sbr.rel (%p552) target = $region56
        $region55: #{tpu_custom_call.1} parent=39 // pred_region
          %s556 = ssub.s32 512, 512
          %557 = vsyncadd %s526, %s556
          %s558 = smul.addr %s33, 4
          %s559 = sadd.s32 %s34, %s558
          %s560 = smul.addr %s559, 128
          %s561 = scalar_lea.hbm %s6, %s560
          %s562 = sshll.u32 %s529, 4
          %s563 = int_to_ptr.vmem [resolvable:$true] %s562
          %568 = dma.vmem_to_hbm [thread:$0]  %s563, 512, %s561, %s526, 128, 128, 8
        $region56: #{tpu_custom_call.1} parent=39 // pred_fallthru
          _
        // Predicated region
        $region57: #{tpu_custom_call.1} parent=39 // pred_check
          %p569 = pneg %p229
        $region58: #{tpu_custom_call.1} parent=39 // pred_check_branch
          %571 = sbr.rel (%p569) target = $region60
        $region59: #{tpu_custom_call.1} parent=39 // pred_region
          %s573 = ssub.s32 512, 512
          %574 = vsyncadd %s531, %s573
          %s575 = smul.addr %s33, 4
          %s576 = sadd.s32 %s34, %s575
          %s577 = smul.addr %s576, 128
          %s578 = scalar_lea.hbm %s7, %s577
          %s579 = sshll.u32 %s534, 4
          %s580 = int_to_ptr.vmem [resolvable:$true] %s579
          %585 = dma.vmem_to_hbm [thread:$0]  %s580, 512, %s578, %s531, 128, 128, 8
        $region60: #{tpu_custom_call.1} parent=39 // pred_fallthru
          _
      $region40: #{tpu_custom_call.1} parent=5 // pred_fallthru
        _
      %p586 = scmp.le.s32.totalorder 2, %s24
      // Predicated region
      $region61: #{tpu_custom_call.1} parent=5 // pred_check
        %p587 = pneg %p586
      $region62: #{tpu_custom_call.1} parent=5 // pred_check_branch
        %589 = sbr.rel (%p587) target = $region64
      $region63: #{tpu_custom_call.1} parent=5 // pred_region
        %s590 = ssub.s32 %s24, 2
        // Predicated region
        $region65: #{tpu_custom_call.1} parent=63 // pred_check
          %p591 = pneg %p179
        $region66: #{tpu_custom_call.1} parent=63 // pred_check_branch
          %593 = sbr.rel (%p591) target = $region68
        $region67: #{tpu_custom_call.1} parent=63 // pred_region
          %s594 = sand.u32 %s164, 1
          %s595 = scalar_lea.sflag [#allocation4], %s594
          %s596 = sand.u32 %s164, 1
          %s597 = smul.addr %s596, 32
          %s598 = scalar_lea.vmem [#allocation7], %s597
          %599 = dma.done %s595, 512
        $region68: #{tpu_custom_call.1} parent=63 // pred_fallthru
          _
        // Predicated region
        $region69: #{tpu_custom_call.1} parent=63 // pred_check
          %p600 = pneg %p207
        $region70: #{tpu_custom_call.1} parent=63 // pred_check_branch
          %602 = sbr.rel (%p600) target = $region72
        $region71: #{tpu_custom_call.1} parent=63 // pred_region
          %s603 = sand.u32 %s30, 1
          %s604 = scalar_lea.sflag [#allocation9], %s603
          %s605 = sand.u32 %s192, 1
          %s606 = smul.addr %s605, 32
          %s607 = scalar_lea.vmem [#allocation8], %s606
          %608 = dma.done %s604, 512
        $region72: #{tpu_custom_call.1} parent=63 // pred_fallthru
          _
        // Predicated region
        $region73: #{tpu_custom_call.1} parent=63 // pred_check
          %p609 = pneg %p235
        $region74: #{tpu_custom_call.1} parent=63 // pred_check_branch
          %611 = sbr.rel (%p609) target = $region76
        $region75: #{tpu_custom_call.1} parent=63 // pred_region
          %s612 = sand.u32 %s30, 1
          %s613 = scalar_lea.sflag [#allocation9], %s612
          %s614 = sand.u32 %s220, 1
          %s615 = smul.addr %s614, 32
          %s616 = scalar_lea.vmem [#allocation10], %s615
          %617 = dma.done %s613, 512
        $region76: #{tpu_custom_call.1} parent=63 // pred_fallthru
          _
      $region64: #{tpu_custom_call.1} parent=5 // pred_fallthru
        _
    $region6: #{tpu_custom_call.1} parent=1 // loop_footer
      %s28 = sadd.s32 1, %s24
    $region7: #{tpu_custom_call.1} parent=1 // loop_footer_branch
      %23 = sbr.rel target = $region3
    $region8: #{tpu_custom_call.1} parent=1 // loop_exit
      _
    %618 = vsyncpa [#allocation3], 1
    %s619 = scalar_lea.sflag [#allocation3], 1
    %620 = vsyncpa %s619, 1
    %621 = vsyncpa [#allocation6], 1
    %622 = vsyncpa [#allocation4], 1
    %s623 = scalar_lea.sflag [#allocation4], 1
    %624 = vsyncpa %s623, 1
    %625 = vsyncpa [#allocation9], 1
    %s626 = scalar_lea.sflag [#allocation9], 1
    %627 = vsyncpa %s626, 1

</llo_original>
